<compile_context>
chip_gen: v6e
topology: v6e:2x2x1
jax: 0.10.0
libtpu: 0.0.40
codegen_flags: <defaults>
</compile_context>

<pallas_src>
import functools

import jax
import jax.numpy as jnp
from jax.experimental import pallas as pl
from jax.experimental.pallas import tpu as pltpu


def _round_up(x, m):
    return (x + m - 1) // m * m


def _is_multi_tensorcore():
    """v7x has 2 TensorCores per chip; everything else listed has 1."""
    try:
        kind = jax.devices()[0].device_kind.lower()
    except Exception:
        return False
    return "v7" in kind


def _linear_relu_kernel(x_ref, w_ref, b_ref, o_ref):
    """One (tm, tn) output tile; full-K contraction in a single MXU dot.

    The weight tile is fed to the MXU in its storage dtype (bf16 fast path);
    the small X tile is cast to match.  Accumulation stays f32.
    """
    x = x_ref[...].astype(w_ref.dtype)
    y = jnp.dot(x, w_ref[...], preferred_element_type=jnp.float32)
    y = y + b_ref[...]                      # bias kept in f32
    o_ref[...] = jnp.maximum(y, 0.0).astype(o_ref.dtype)


def _pick_tiles(M, K_pad, N_pad, x_bytes, w_bytes, out_bytes, multi_tc):
    """Pick (tm, tn).

    tm: sublane-aligned, capped.  tn: as wide as the (dtype-aware) VMEM
    budget allows; on multi-TC parts keep >= 2 N-programs so both cores
    stream weight columns.
    """
    tm = min(_round_up(M, 8), 256)
    budget = 24 * 1024 * 1024               # headroom under 32 MiB scoped VMEM

    candidates = [tn for tn in range(N_pad, 127, -128) if N_pad % tn == 0]
    fallback = None
    for tn in candidates:
        if multi_tc and N_pad > 128 and (N_pad // tn) < 2:
            continue                        # v7x: need >= 2 weight-column programs
        vmem = (2 * tm * K_pad * x_bytes    # X slab (double-buffered)
                + 2 * K_pad * tn * w_bytes  # weight slab (double-buffered)
                + 2 * tn * 4                # bias slab
                + 2 * tm * tn * out_bytes)  # output tile
        if vmem <= budget:
            return tm, tn
        fallback = tn
    return tm, (fallback if fallback is not None else 128)


def _linear_relu(x2d, w_t, bias2d, *, tm, tn):
    """x2d: (M, K), w_t: (K, N), bias2d: (1, N) -> relu(x2d @ w_t + bias).

    Weight-stationary grid: N-tile axis outermost, M-tile axis innermost, so
    the weight block index is constant across the inner axis and each weight
    column slab is DMA'd from HBM exactly once.
    """
    M, K = x2d.shape
    K2, N = w_t.shape
    assert K == K2 and M % tm == 0 and N % tn == 0

    return pl.pallas_call(
        _linear_relu_kernel,
        out_shape=jax.ShapeDtypeStruct((M, N), x2d.dtype),
        grid_spec=pltpu.PrefetchScalarGridSpec(
            num_scalar_prefetch=0,
            grid=(N // tn, M // tm),                       # (j: N tiles, i: M tiles)
            in_specs=[
                pl.BlockSpec((tm, K), lambda j, i: (i, 0)),   # X row slab (full K)
                pl.BlockSpec((K, tn), lambda j, i: (0, j)),   # weight column slab
                pl.BlockSpec((1, tn), lambda j, i: (0, j)),   # bias slab
            ],
            out_specs=pl.BlockSpec((tm, tn), lambda j, i: (i, j)),
        ),
        compiler_params=pltpu.CompilerParams(
            dimension_semantics=("parallel", "parallel"),
            vmem_limit_bytes=32 * 1024 * 1024,
        ),
    )(x2d, w_t, bias2d)


@functools.partial(jax.jit, static_argnames=("multi_tc",))
def _forward(x, w_t, bias2d, *, multi_tc):
    """Flatten -> Linear+ReLU (Pallas) -> reshape back."""
    original_shape = x.shape
    if x.ndim == 5:
        T, B, C, H, W = original_shape
        N = C * H * W
    elif x.ndim == 3:
        T, B, N = original_shape
    else:
        raise ValueError("expected 3-D or 5-D input")

    n_pad = w_t.shape[0]                     # padded K == padded N (square W)
    assert N <= n_pad

    M = T * B
    tm, tn = _pick_tiles(
        M, n_pad, n_pad,
        x_bytes=x.dtype.itemsize,
        w_bytes=w_t.dtype.itemsize,
        out_bytes=x.dtype.itemsize,
        multi_tc=multi_tc,
    )
    M_pad = _round_up(M, tm)

    x2d = x.reshape(M, N)
    if M_pad != M or n_pad != N:
        x2d = jnp.pad(x2d, ((0, M_pad - M), (0, n_pad - N)))

    y2d = _linear_relu(x2d, w_t, bias2d, tm=tm, tn=tn)
    y2d = y2d[:M, :N]

    if len(original_shape) == 5:
        return y2d.reshape(original_shape)
    return y2d.reshape(T, B, N)


class DynamicReshapeModuleJAX:
    """JAX/Pallas port of DynamicReshapeModule with blocks = Linear(N,N)+ReLU."""

    def __init__(self, n_features, *, key, dtype=jnp.float32,
                 weight_dtype=jnp.bfloat16):
        kw, kb = jax.random.split(key)
        bound = 1.0 / float(n_features) ** 0.5
        # PyTorch nn.Linear weight is (out, in); store transposed (in, out).
        w = jax.random.uniform(
            kw, (n_features, n_features), dtype=jnp.float32,
            minval=-bound, maxval=bound)
        b = jax.random.uniform(
            kb, (n_features,), dtype=jnp.float32, minval=-bound, maxval=bound)

        n_pad = _round_up(n_features, 128)   # padded K == padded N (square W)
        self.n_features = n_features
        self.dtype = dtype
        self.weight_dtype = weight_dtype
        self._n_pad = n_pad
        self._multi_tc = _is_multi_tensorcore()

        w_t = w.T.astype(weight_dtype)       # (N_in, N_out)
        self.w_t = jnp.pad(
            w_t, ((0, n_pad - n_features), (0, n_pad - n_features)))
        self.bias = b.astype(jnp.float32)    # unpadded, for reference use
        self.bias2d = jnp.pad(b, (0, n_pad - n_features)).reshape(1, n_pad)

    def __call__(self, x):
        return _forward(x, self.w_t, self.bias2d, multi_tc=self._multi_tc)


if __name__ == "__main__":
    key = jax.random.PRNGKey(0)
    k_x, k_mod = jax.random.split(key)

    # Small shapes consistent with the module's 5-D path.
    T, B, C, H, W = 8, 2, 4, 16, 16          # N = C*H*W = 1024, M = T*B = 16
    x = jax.random.normal(k_x, (T, B, C, H, W), dtype=jnp.float32)

    mod = DynamicReshapeModuleJAX(C * H * W, key=k_mod)
    out = jax.block_until_ready(mod(x))
    assert out.shape == (T, B, C, H, W)

    # Reference in plain JAX mirroring the kernel's arithmetic: bf16 operands
    # into an f32-accumulating matmul, using the exact weight bits streamed.
    N = C * H * W
    wt_ref = mod.w_t[:N, :N].astype(jnp.float32)
    x2d = x.reshape(T * B, N)
    x2d_q = x2d.astype(mod.weight_dtype).astype(jnp.float32)
    ref = jnp.maximum(x2d_q @ wt_ref + mod.bias, 0.0).reshape(T, B, C, H, W)
    tol = 1e-4 if mod.weight_dtype == jnp.float32 else 5e-3
    assert jnp.allclose(out, ref, atol=tol, rtol=tol)

    # Also exercise the 3-D path.
    x3 = x.reshape(T, B, N)
    out3 = jax.block_until_ready(mod(x3))
    assert out3.shape == (T, B, N)
    assert jnp.allclose(out3, ref.reshape(T, B, -1), atol=tol, rtol=tol)

    print("KERNEL_OK")
</pallas_src>

<mosaic_0001>
module attributes {stable_mosaic.version = 11 : i64} {
  func.func @_linear_relu_kernel(%arg0: i32, %arg1: i32, %arg2: memref<16x1024xf32, #tpu.memory_space<vmem>>, %arg3: memref<1024x1024xbf16, #tpu.memory_space<vmem>>, %arg4: memref<1x1024xf32, #tpu.memory_space<vmem>>, %arg5: memref<16x1024xf32, #tpu.memory_space<vmem>>) attributes {dimension_semantics = [#tpu.dimension_semantics<parallel>, #tpu.dimension_semantics<parallel>], iteration_bounds = array<i64: 1, 1>, scalar_prefetch = 0 : i64, scratch_operands = 0 : i64, tpu.core_type = #tpu.core_type<tc>, window_params = [{transform_indices = @transform_0, window_bounds = array<i64: 16, 1024>}, {transform_indices = @transform_1, window_bounds = array<i64: 1024, 1024>}, {transform_indices = @transform_2, window_bounds = array<i64: 1, 1024>}, {transform_indices = @transform_3, window_bounds = array<i64: 16, 1024>}]} {
    %c0 = arith.constant 0 : index
    %c0_0 = arith.constant 0 : index
    %0 = vector.load %arg2[%c0, %c0_0] : memref<16x1024xf32, #tpu.memory_space<vmem>>, vector<16x1024xf32>
    %1 = arith.truncf %0 : vector<16x1024xf32> to vector<16x1024xbf16>
    %c0_1 = arith.constant 0 : index
    %c0_2 = arith.constant 0 : index
    %2 = vector.load %arg3[%c0_1, %c0_2] : memref<1024x1024xbf16, #tpu.memory_space<vmem>>, vector<1024x1024xbf16>
    %cst = arith.constant dense<0.000000e+00> : vector<16x1024xf32>
    %3 = tpu.matmul %1, %2, %cst {dimension_numbers = #tpu.dot_dimension_numbers<[1], [0], [0], [1], [0, 0, 1, 1], [], []>} : vector<16x1024xbf16>, vector<1024x1024xbf16>, vector<16x1024xf32> -> vector<16x1024xf32>
    %c0_3 = arith.constant 0 : index
    %c0_4 = arith.constant 0 : index
    %4 = vector.load %arg4[%c0_3, %c0_4] : memref<1x1024xf32, #tpu.memory_space<vmem>>, vector<1x1024xf32>
    %5 = vector.broadcast %4 : vector<1x1024xf32> to vector<16x1024xf32>
    %6 = arith.addf %3, %5 : vector<16x1024xf32>
    %cst_5 = arith.constant 0.000000e+00 : f32
    %7 = vector.broadcast %cst_5 : f32 to vector<16x1024xf32>
    %8 = arith.maximumf %6, %7 : vector<16x1024xf32>
    %c0_6 = arith.constant 0 : index
    %c0_7 = arith.constant 0 : index
    %9 = vector.load %arg5[%c0_6, %c0_7] : memref<16x1024xf32, #tpu.memory_space<vmem>>, vector<16x1024xf32>
    tpu.vector_store %arg5[%c0_6, %c0_7], %8 {strides = array<i32>} : memref<16x1024xf32, #tpu.memory_space<vmem>>, vector<16x1024xf32>,
    return
  }
  func.func @transform_0(%arg0: i32, %arg1: i32) -> (i32, i32) {
    %c0_i32 = arith.constant 0 : i32
    %c0_i32_0 = arith.constant 0 : i32
    return %arg1, %c0_i32 : i32, i32
  }
  func.func @transform_1(%arg0: i32, %arg1: i32) -> (i32, i32) {
    %c0_i32 = arith.constant 0 : i32
    %c0_i32_0 = arith.constant 0 : i32
    return %c0_i32, %arg0 : i32, i32
  }
  func.func @transform_2(%arg0: i32, %arg1: i32) -> (i32, i32) {
    %c0_i32 = arith.constant 0 : i32
    %c0_i32_0 = arith.constant 0 : i32
    return %c0_i32, %arg0 : i32, i32
  }
  func.func @transform_3(%arg0: i32, %arg1: i32) -> (i32, i32) {
    %c0_i32 = arith.constant 0 : i32
    return %arg1, %arg0 : i32, i32
  }
}

</mosaic_0001>

<llo_original>
// kernel: _forward.1
$region0: #{_forward.1}
  #allocation0 [shape = 'u32[]', space=smem, size = 0x4, offset = 0x4, fixed_abs, tag = 'smem constant byte address 0x4 - core index']
  #allocation1 [shape = 'u32[144,128]{1,0:T(1,128)}', space=vmem, size = 0x12000, scoped, tag = 'internal scratch']
  %s0 = inlined_call_operand.vmem [shape: f32[16,1024], index: 0, kind: input, shape index: {}]
  %s1 = inlined_call_operand.hbm [shape: bf16[1024,1024], index: 1, kind: input, shape index: {}]
  %s2 = inlined_call_operand.hbm [shape: f32[1,1024], index: 2, kind: input, shape index: {}]
  %s3 = inlined_call_operand.vmem [shape: f32[16,1024], index: 3, kind: output, shape index: {}]
  %s4 = sld [smem:[#allocation0]]
  $region30: #{_forward.1} parent=0
    _
  %s6 = ssub.s32 1, %s4
  %s7 = scalar_select 0, %s6, %s4
  $region1: #{_forward.1} parent=0
    #allocation2 [shape = 'u8[2097152]{0}', space=vmem, size = 0x200000, scoped, tag = 'input window, operand 1, single buffered']
    #allocation3 [shape = 's32[1]{0}', space=sflag, size = 0x4, scoped, tag = 'scoped memory for _forward.1']
    #allocation4 [shape = 'u8[4096]{0}', space=vmem, size = 0x1000, scoped, tag = 'input window, operand 2, single buffered']
    #allocation5 [shape = 's32[1]{0}', space=sflag, size = 0x4, scoped, tag = 'scoped memory for _forward.1']
    %8 = vsyncpa [#allocation3], 0
    %9 = vsyncpa [#allocation5], 0
    // Predicated region
    $region2: #{_forward.1} parent=1 // pred_check
      _
    $region3: #{_forward.1} parent=1 // pred_check_branch
      %11 = sbr.rel (0) target = $region5
    $region4: #{_forward.1} parent=1 // pred_region
      _
    $region5: #{_forward.1} parent=1 // pred_fallthru
      _
    // Predicated region
    $region6: #{_forward.1} parent=1 // pred_check
      _
    $region7: #{_forward.1} parent=1 // pred_check_branch
      %13 = sbr.rel (0) target = $region9
    $region8: #{_forward.1} parent=1 // pred_region
      %s15 = ssub.s32 65536, 65536
      %16 = vsyncadd [#allocation3], %s15
      %s17 = sshll.u32 [#allocation2], 4
      %s18 = int_to_ptr.vmem [resolvable:$true] %s17
      %23 = dma.hbm_to_vmem [thread:$0]  %s1, 65536, %s18, [#allocation3], 512, 512, 32
    $region9: #{_forward.1} parent=1 // pred_fallthru
      _
    // Predicated region
    $region10: #{_forward.1} parent=1 // pred_check
      _
    $region11: #{_forward.1} parent=1 // pred_check_branch
      %25 = sbr.rel (0) target = $region13
    $region12: #{_forward.1} parent=1 // pred_region
      %s27 = ssub.s32 128, 128
      %28 = vsyncadd [#allocation5], %s27
      %s30 = sshll.u32 [#allocation4], 4
      %s31 = int_to_ptr.vmem [resolvable:$true] %s30
      %33 = dma.hbm_to_vmem [thread:$0]  %s2, 128, %s31, [#allocation5]
    $region13: #{_forward.1} parent=1 // pred_fallthru
      _
    // Predicated region
    $region14: #{_forward.1} parent=1 // pred_check
      _
    $region15: #{_forward.1} parent=1 // pred_check_branch
      %35 = sbr.rel (0) target = $region17
    $region16: #{_forward.1} parent=1 // pred_region
      %36 = dma.done [#allocation3], 65536
    $region17: #{_forward.1} parent=1 // pred_fallthru
      _
    // Predicated region
    $region18: #{_forward.1} parent=1 // pred_check
      _
    $region19: #{_forward.1} parent=1 // pred_check_branch
      %38 = sbr.rel (0) target = $region21
    $region20: #{_forward.1} parent=1 // pred_region
      %39 = dma.done [#allocation5], 128
    $region21: #{_forward.1} parent=1 // pred_fallthru
      _
    %v40 = vld [vmem:[%s0] sm:$0xff]
    %v41 = vld [vmem:[%s0 + $0x8] sm:$0xff]
    %v42 = vld [vmem:[%s0 + $0x10] sm:$0xff]
    %v43 = vld [vmem:[%s0 + $0x18] sm:$0xff]
    %v44 = vld [vmem:[%s0 + $0x20] sm:$0xff]
    %v45 = vld [vmem:[%s0 + $0x28] sm:$0xff]
    %v46 = vld [vmem:[%s0 + $0x30] sm:$0xff]
    %v47 = vld [vmem:[%s0 + $0x38] sm:$0xff]
    %v48 = vld [vmem:[%s0 + $0x40] sm:$0xff]
    %v49 = vld [vmem:[%s0 + $0x48] sm:$0xff]
    %v50 = vld [vmem:[%s0 + $0x50] sm:$0xff]
    %v51 = vld [vmem:[%s0 + $0x58] sm:$0xff]
    %v52 = vld [vmem:[%s0 + $0x60] sm:$0xff]
    %v53 = vld [vmem:[%s0 + $0x68] sm:$0xff]
    %v54 = vld [vmem:[%s0 + $0x70] sm:$0xff]
    %v55 = vld [vmem:[%s0 + $0x78] sm:$0xff]
    %v56 = vpack.c.bf16 %v48, %v40
    %v57 = vpack.c.bf16 %v49, %v41
    %v58 = vpack.c.bf16 %v50, %v42
    %v59 = vpack.c.bf16 %v51, %v43
    %v60 = vpack.c.bf16 %v52, %v44
    %v61 = vpack.c.bf16 %v53, %v45
    %v62 = vpack.c.bf16 %v54, %v46
    %v63 = vpack.c.bf16 %v55, %v47
    %v64 = vld [vmem:[#allocation2] sm:$0xff]
    %v65 = vld [vmem:[#allocation2 + $0x8] sm:$0xff]
    %v66 = vld [vmem:[#allocation2 + $0x10] sm:$0xff]
    %v67 = vld [vmem:[#allocation2 + $0x18] sm:$0xff]
    %v68 = vld [vmem:[#allocation2 + $0x20] sm:$0xff]
    %v69 = vld [vmem:[#allocation2 + $0x28] sm:$0xff]
    %v70 = vld [vmem:[#allocation2 + $0x30] sm:$0xff]
    %v71 = vld [vmem:[#allocation2 + $0x38] sm:$0xff]
    %v72 = vld [vmem:[#allocation2 + $0x40] sm:$0xff]
    %v73 = vld [vmem:[#allocation2 + $0x48] sm:$0xff]
    %v74 = vld [vmem:[#allocation2 + $0x50] sm:$0xff]
    %v75 = vld [vmem:[#allocation2 + $0x58] sm:$0xff]
    %v76 = vld [vmem:[#allocation2 + $0x60] sm:$0xff]
    %v77 = vld [vmem:[#allocation2 + $0x68] sm:$0xff]
    %v78 = vld [vmem:[#allocation2 + $0x70] sm:$0xff]
    %v79 = vld [vmem:[#allocation2 + $0x78] sm:$0xff]
    %v80 = vld [vmem:[#allocation2 + $0x80] sm:$0xff]
    %v81 = vld [vmem:[#allocation2 + $0x88] sm:$0xff]
    %v82 = vld [vmem:[#allocation2 + $0x90] sm:$0xff]
    %v83 = vld [vmem:[#allocation2 + $0x98] sm:$0xff]
    %v84 = vld [vmem:[#allocation2 + $0xa0] sm:$0xff]
    %v85 = vld [vmem:[#allocation2 + $0xa8] sm:$0xff]
    %v86 = vld [vmem:[#allocation2 + $0xb0] sm:$0xff]
    %v87 = vld [vmem:[#allocation2 + $0xb8] sm:$0xff]
    %v88 = vld [vmem:[#allocation2 + $0xc0] sm:$0xff]
    %v89 = vld [vmem:[#allocation2 + $0xc8] sm:$0xff]
    %v90 = vld [vmem:[#allocation2 + $0xd0] sm:$0xff]
    %v91 = vld [vmem:[#allocation2 + $0xd8] sm:$0xff]
    %v92 = vld [vmem:[#allocation2 + $0xe0] sm:$0xff]
    %v93 = vld [vmem:[#allocation2 + $0xe8] sm:$0xff]
    %v94 = vld [vmem:[#allocation2 + $0xf0] sm:$0xff]
    %v95 = vld [vmem:[#allocation2 + $0xf8] sm:$0xff]
    %v96 = vld [vmem:[#allocation2 + $0x100] sm:$0xff]
    %v97 = vld [vmem:[#allocation2 + $0x108] sm:$0xff]
    %v98 = vld [vmem:[#allocation2 + $0x110] sm:$0xff]
    %v99 = vld [vmem:[#allocation2 + $0x118] sm:$0xff]
    %v100 = vld [vmem:[#allocation2 + $0x120] sm:$0xff]
    %v101 = vld [vmem:[#allocation2 + $0x128] sm:$0xff]
    %v102 = vld [vmem:[#allocation2 + $0x130] sm:$0xff]
    %v103 = vld [vmem:[#allocation2 + $0x138] sm:$0xff]
    %v104 = vld [vmem:[#allocation2 + $0x140] sm:$0xff]
    %v105 = vld [vmem:[#allocation2 + $0x148] sm:$0xff]
    %v106 = vld [vmem:[#allocation2 + $0x150] sm:$0xff]
    %v107 = vld [vmem:[#allocation2 + $0x158] sm:$0xff]
    %v108 = vld [vmem:[#allocation2 + $0x160] sm:$0xff]
    %v109 = vld [vmem:[#allocation2 + $0x168] sm:$0xff]
    %v110 = vld [vmem:[#allocation2 + $0x170] sm:$0xff]
    %v111 = vld [vmem:[#allocation2 + $0x178] sm:$0xff]
    %v112 = vld [vmem:[#allocation2 + $0x180] sm:$0xff]
    %v113 = vld [vmem:[#allocation2 + $0x188] sm:$0xff]
    %v114 = vld [vmem:[#allocation2 + $0x190] sm:$0xff]
    %v115 = vld [vmem:[#allocation2 + $0x198] sm:$0xff]
    %v116 = vld [vmem:[#allocation2 + $0x1a0] sm:$0xff]
    %v117 = vld [vmem:[#allocation2 + $0x1a8] sm:$0xff]
    %v118 = vld [vmem:[#allocation2 + $0x1b0] sm:$0xff]
    %v119 = vld [vmem:[#allocation2 + $0x1b8] sm:$0xff]
    %v120 = vld [vmem:[#allocation2 + $0x1c0] sm:$0xff]
    %v121 = vld [vmem:[#allocation2 + $0x1c8] sm:$0xff]
    %v122 = vld [vmem:[#allocation2 + $0x1d0] sm:$0xff]
    %v123 = vld [vmem:[#allocation2 + $0x1d8] sm:$0xff]
    %v124 = vld [vmem:[#allocation2 + $0x1e0] sm:$0xff]
    %v125 = vld [vmem:[#allocation2 + $0x1e8] sm:$0xff]
    %v126 = vld [vmem:[#allocation2 + $0x1f0] sm:$0xff]
    %v127 = vld [vmem:[#allocation2 + $0x1f8] sm:$0xff]
    %v128 = vld [vmem:[#allocation2 + $0x200] sm:$0xff]
    %v129 = vld [vmem:[#allocation2 + $0x208] sm:$0xff]
    %v130 = vld [vmem:[#allocation2 + $0x210] sm:$0xff]
    %v131 = vld [vmem:[#allocation2 + $0x218] sm:$0xff]
    %v132 = vld [vmem:[#allocation2 + $0x220] sm:$0xff]
    %v133 = vld [vmem:[#allocation2 + $0x228] sm:$0xff]
    %v134 = vld [vmem:[#allocation2 + $0x230] sm:$0xff]
    %v135 = vld [vmem:[#allocation2 + $0x238] sm:$0xff]
    %v136 = vld [vmem:[#allocation2 + $0x240] sm:$0xff]
    %v137 = vld [vmem:[#allocation2 + $0x248] sm:$0xff]
    %v138 = vld [vmem:[#allocation2 + $0x250] sm:$0xff]
    %v139 = vld [vmem:[#allocation2 + $0x258] sm:$0xff]
    %v140 = vld [vmem:[#allocation2 + $0x260] sm:$0xff]
    %v141 = vld [vmem:[#allocation2 + $0x268] sm:$0xff]
    %v142 = vld [vmem:[#allocation2 + $0x270] sm:$0xff]
    %v143 = vld [vmem:[#allocation2 + $0x278] sm:$0xff]
    %v144 = vld [vmem:[#allocation2 + $0x280] sm:$0xff]
    %v145 = vld [vmem:[#allocation2 + $0x288] sm:$0xff]
    %v146 = vld [vmem:[#allocation2 + $0x290] sm:$0xff]
    %v147 = vld [vmem:[#allocation2 + $0x298] sm:$0xff]
    %v148 = vld [vmem:[#allocation2 + $0x2a0] sm:$0xff]
    %v149 = vld [vmem:[#allocation2 + $0x2a8] sm:$0xff]
    %v150 = vld [vmem:[#allocation2 + $0x2b0] sm:$0xff]
    %v151 = vld [vmem:[#allocation2 + $0x2b8] sm:$0xff]
    %v152 = vld [vmem:[#allocation2 + $0x2c0] sm:$0xff]
    %v153 = vld [vmem:[#allocation2 + $0x2c8] sm:$0xff]
    %v154 = vld [vmem:[#allocation2 + $0x2d0] sm:$0xff]
    %v155 = vld [vmem:[#allocation2 + $0x2d8] sm:$0xff]
    %v156 = vld [vmem:[#allocation2 + $0x2e0] sm:$0xff]
    %v157 = vld [vmem:[#allocation2 + $0x2e8] sm:$0xff]
    %v158 = vld [vmem:[#allocation2 + $0x2f0] sm:$0xff]
    %v159 = vld [vmem:[#allocation2 + $0x2f8] sm:$0xff]
    %v160 = vld [vmem:[#allocation2 + $0x300] sm:$0xff]
    %v161 = vld [vmem:[#allocation2 + $0x308] sm:$0xff]
    %v162 = vld [vmem:[#allocation2 + $0x310] sm:$0xff]
    %v163 = vld [vmem:[#allocation2 + $0x318] sm:$0xff]
    %v164 = vld [vmem:[#allocation2 + $0x320] sm:$0xff]
    %v165 = vld [vmem:[#allocation2 + $0x328] sm:$0xff]
    %v166 = vld [vmem:[#allocation2 + $0x330] sm:$0xff]
    %v167 = vld [vmem:[#allocation2 + $0x338] sm:$0xff]
    %v168 = vld [vmem:[#allocation2 + $0x340] sm:$0xff]
    %v169 = vld [vmem:[#allocation2 + $0x348] sm:$0xff]
    %v170 = vld [vmem:[#allocation2 + $0x350] sm:$0xff]
    %v171 = vld [vmem:[#allocation2 + $0x358] sm:$0xff]
    %v172 = vld [vmem:[#allocation2 + $0x360] sm:$0xff]
    %v173 = vld [vmem:[#allocation2 + $0x368] sm:$0xff]
    %v174 = vld [vmem:[#allocation2 + $0x370] sm:$0xff]
    %v175 = vld [vmem:[#allocation2 + $0x378] sm:$0xff]
    %v176 = vld [vmem:[#allocation2 + $0x380] sm:$0xff]
    %v177 = vld [vmem:[#allocation2 + $0x388] sm:$0xff]
    %v178 = vld [vmem:[#allocation2 + $0x390] sm:$0xff]
    %v179 = vld [vmem:[#allocation2 + $0x398] sm:$0xff]
    %v180 = vld [vmem:[#allocation2 + $0x3a0] sm:$0xff]
    %v181 = vld [vmem:[#allocation2 + $0x3a8] sm:$0xff]
    %v182 = vld [vmem:[#allocation2 + $0x3b0] sm:$0xff]
    %v183 = vld [vmem:[#allocation2 + $0x3b8] sm:$0xff]
    %v184 = vld [vmem:[#allocation2 + $0x3c0] sm:$0xff]
    %v185 = vld [vmem:[#allocation2 + $0x3c8] sm:$0xff]
    %v186 = vld [vmem:[#allocation2 + $0x3d0] sm:$0xff]
    %v187 = vld [vmem:[#allocation2 + $0x3d8] sm:$0xff]
    %v188 = vld [vmem:[#allocation2 + $0x3e0] sm:$0xff]
    %v189 = vld [vmem:[#allocation2 + $0x3e8] sm:$0xff]
    %v190 = vld [vmem:[#allocation2 + $0x3f0] sm:$0xff]
    %v191 = vld [vmem:[#allocation2 + $0x3f8] sm:$0xff]
    %v192 = vld [vmem:[#allocation2 + $0x400] sm:$0xff]
    %v193 = vld [vmem:[#allocation2 + $0x408] sm:$0xff]
    %v194 = vld [vmem:[#allocation2 + $0x410] sm:$0xff]
    %v195 = vld [vmem:[#allocation2 + $0x418] sm:$0xff]
    %v196 = vld [vmem:[#allocation2 + $0x420] sm:$0xff]
    %v197 = vld [vmem:[#allocation2 + $0x428] sm:$0xff]
    %v198 = vld [vmem:[#allocation2 + $0x430] sm:$0xff]
    %v199 = vld [vmem:[#allocation2 + $0x438] sm:$0xff]
    %v200 = vld [vmem:[#allocation2 + $0x440] sm:$0xff]
    %v201 = vld [vmem:[#allocation2 + $0x448] sm:$0xff]
    %v202 = vld [vmem:[#allocation2 + $0x450] sm:$0xff]
    %v203 = vld [vmem:[#allocation2 + $0x458] sm:$0xff]
    %v204 = vld [vmem:[#allocation2 + $0x460] sm:$0xff]
    %v205 = vld [vmem:[#allocation2 + $0x468] sm:$0xff]
    %v206 = vld [vmem:[#allocation2 + $0x470] sm:$0xff]
    %v207 = vld [vmem:[#allocation2 + $0x478] sm:$0xff]
    %v208 = vld [vmem:[#allocation2 + $0x480] sm:$0xff]
    %v209 = vld [vmem:[#allocation2 + $0x488] sm:$0xff]
    %v210 = vld [vmem:[#allocation2 + $0x490] sm:$0xff]
    %v211 = vld [vmem:[#allocation2 + $0x498] sm:$0xff]
    %v212 = vld [vmem:[#allocation2 + $0x4a0] sm:$0xff]
    %v213 = vld [vmem:[#allocation2 + $0x4a8] sm:$0xff]
    %v214 = vld [vmem:[#allocation2 + $0x4b0] sm:$0xff]
    %v215 = vld [vmem:[#allocation2 + $0x4b8] sm:$0xff]
    %v216 = vld [vmem:[#allocation2 + $0x4c0] sm:$0xff]
    %v217 = vld [vmem:[#allocation2 + $0x4c8] sm:$0xff]
    %v218 = vld [vmem:[#allocation2 + $0x4d0] sm:$0xff]
    %v219 = vld [vmem:[#allocation2 + $0x4d8] sm:$0xff]
    %v220 = vld [vmem:[#allocation2 + $0x4e0] sm:$0xff]
    %v221 = vld [vmem:[#allocation2 + $0x4e8] sm:$0xff]
    %v222 = vld [vmem:[#allocation2 + $0x4f0] sm:$0xff]
    %v223 = vld [vmem:[#allocation2 + $0x4f8] sm:$0xff]
    %v224 = vld [vmem:[#allocation2 + $0x500] sm:$0xff]
    %v225 = vld [vmem:[#allocation2 + $0x508] sm:$0xff]
    %v226 = vld [vmem:[#allocation2 + $0x510] sm:$0xff]
    %v227 = vld [vmem:[#allocation2 + $0x518] sm:$0xff]
    %v228 = vld [vmem:[#allocation2 + $0x520] sm:$0xff]
    %v229 = vld [vmem:[#allocation2 + $0x528] sm:$0xff]
    %v230 = vld [vmem:[#allocation2 + $0x530] sm:$0xff]
    %v231 = vld [vmem:[#allocation2 + $0x538] sm:$0xff]
    %v232 = vld [vmem:[#allocation2 + $0x540] sm:$0xff]
    %v233 = vld [vmem:[#allocation2 + $0x548] sm:$0xff]
    %v234 = vld [vmem:[#allocation2 + $0x550] sm:$0xff]
    %v235 = vld [vmem:[#allocation2 + $0x558] sm:$0xff]
    %v236 = vld [vmem:[#allocation2 + $0x560] sm:$0xff]
    %v237 = vld [vmem:[#allocation2 + $0x568] sm:$0xff]
    %v238 = vld [vmem:[#allocation2 + $0x570] sm:$0xff]
    %v239 = vld [vmem:[#allocation2 + $0x578] sm:$0xff]
    %v240 = vld [vmem:[#allocation2 + $0x580] sm:$0xff]
    %v241 = vld [vmem:[#allocation2 + $0x588] sm:$0xff]
    %v242 = vld [vmem:[#allocation2 + $0x590] sm:$0xff]
    %v243 = vld [vmem:[#allocation2 + $0x598] sm:$0xff]
    %v244 = vld [vmem:[#allocation2 + $0x5a0] sm:$0xff]
    %v245 = vld [vmem:[#allocation2 + $0x5a8] sm:$0xff]
    %v246 = vld [vmem:[#allocation2 + $0x5b0] sm:$0xff]
    %v247 = vld [vmem:[#allocation2 + $0x5b8] sm:$0xff]
    %v248 = vld [vmem:[#allocation2 + $0x5c0] sm:$0xff]
    %v249 = vld [vmem:[#allocation2 + $0x5c8] sm:$0xff]
    %v250 = vld [vmem:[#allocation2 + $0x5d0] sm:$0xff]
    %v251 = vld [vmem:[#allocation2 + $0x5d8] sm:$0xff]
    %v252 = vld [vmem:[#allocation2 + $0x5e0] sm:$0xff]
    %v253 = vld [vmem:[#allocation2 + $0x5e8] sm:$0xff]
    %v254 = vld [vmem:[#allocation2 + $0x5f0] sm:$0xff]
    %v255 = vld [vmem:[#allocation2 + $0x5f8] sm:$0xff]
    %v256 = vld [vmem:[#allocation2 + $0x600] sm:$0xff]
    %v257 = vld [vmem:[#allocation2 + $0x608] sm:$0xff]
    %v258 = vld [vmem:[#allocation2 + $0x610] sm:$0xff]
    %v259 = vld [vmem:[#allocation2 + $0x618] sm:$0xff]
    %v260 = vld [vmem:[#allocation2 + $0x620] sm:$0xff]
    %v261 = vld [vmem:[#allocation2 + $0x628] sm:$0xff]
    %v262 = vld [vmem:[#allocation2 + $0x630] sm:$0xff]
    %v263 = vld [vmem:[#allocation2 + $0x638] sm:$0xff]
    %v264 = vld [vmem:[#allocation2 + $0x640] sm:$0xff]
    %v265 = vld [vmem:[#allocation2 + $0x648] sm:$0xff]
    %v266 = vld [vmem:[#allocation2 + $0x650] sm:$0xff]
    %v267 = vld [vmem:[#allocation2 + $0x658] sm:$0xff]
    %v268 = vld [vmem:[#allocation2 + $0x660] sm:$0xff]
    %v269 = vld [vmem:[#allocation2 + $0x668] sm:$0xff]
    %v270 = vld [vmem:[#allocation2 + $0x670] sm:$0xff]
    %v271 = vld [vmem:[#allocation2 + $0x678] sm:$0xff]
    %v272 = vld [vmem:[#allocation2 + $0x680] sm:$0xff]
    %v273 = vld [vmem:[#allocation2 + $0x688] sm:$0xff]
    %v274 = vld [vmem:[#allocation2 + $0x690] sm:$0xff]
    %v275 = vld [vmem:[#allocation2 + $0x698] sm:$0xff]
    %v276 = vld [vmem:[#allocation2 + $0x6a0] sm:$0xff]
    %v277 = vld [vmem:[#allocation2 + $0x6a8] sm:$0xff]
    %v278 = vld [vmem:[#allocation2 + $0x6b0] sm:$0xff]
    %v279 = vld [vmem:[#allocation2 + $0x6b8] sm:$0xff]
    %v280 = vld [vmem:[#allocation2 + $0x6c0] sm:$0xff]
    %v281 = vld [vmem:[#allocation2 + $0x6c8] sm:$0xff]
    %v282 = vld [vmem:[#allocation2 + $0x6d0] sm:$0xff]
    %v283 = vld [vmem:[#allocation2 + $0x6d8] sm:$0xff]
    %v284 = vld [vmem:[#allocation2 + $0x6e0] sm:$0xff]
    %v285 = vld [vmem:[#allocation2 + $0x6e8] sm:$0xff]
    %v286 = vld [vmem:[#allocation2 + $0x6f0] sm:$0xff]
    %v287 = vld [vmem:[#allocation2 + $0x6f8] sm:$0xff]
    %v288 = vld [vmem:[#allocation2 + $0x700] sm:$0xff]
    %v289 = vld [vmem:[#allocation2 + $0x708] sm:$0xff]
    %v290 = vld [vmem:[#allocation2 + $0x710] sm:$0xff]
    %v291 = vld [vmem:[#allocation2 + $0x718] sm:$0xff]
    %v292 = vld [vmem:[#allocation2 + $0x720] sm:$0xff]
    %v293 = vld [vmem:[#allocation2 + $0x728] sm:$0xff]
    %v294 = vld [vmem:[#allocation2 + $0x730] sm:$0xff]
    %v295 = vld [vmem:[#allocation2 + $0x738] sm:$0xff]
    %v296 = vld [vmem:[#allocation2 + $0x740] sm:$0xff]
    %v297 = vld [vmem:[#allocation2 + $0x748] sm:$0xff]
    %v298 = vld [vmem:[#allocation2 + $0x750] sm:$0xff]
    %v299 = vld [vmem:[#allocation2 + $0x758] sm:$0xff]
    %v300 = vld [vmem:[#allocation2 + $0x760] sm:$0xff]
    %v301 = vld [vmem:[#allocation2 + $0x768] sm:$0xff]
    %v302 = vld [vmem:[#allocation2 + $0x770] sm:$0xff]
    %v303 = vld [vmem:[#allocation2 + $0x778] sm:$0xff]
    %v304 = vld [vmem:[#allocation2 + $0x780] sm:$0xff]
    %v305 = vld [vmem:[#allocation2 + $0x788] sm:$0xff]
    %v306 = vld [vmem:[#allocation2 + $0x790] sm:$0xff]
    %v307 = vld [vmem:[#allocation2 + $0x798] sm:$0xff]
    %v308 = vld [vmem:[#allocation2 + $0x7a0] sm:$0xff]
    %v309 = vld [vmem:[#allocation2 + $0x7a8] sm:$0xff]
    %v310 = vld [vmem:[#allocation2 + $0x7b0] sm:$0xff]
    %v311 = vld [vmem:[#allocation2 + $0x7b8] sm:$0xff]
    %v312 = vld [vmem:[#allocation2 + $0x7c0] sm:$0xff]
    %v313 = vld [vmem:[#allocation2 + $0x7c8] sm:$0xff]
    %v314 = vld [vmem:[#allocation2 + $0x7d0] sm:$0xff]
    %v315 = vld [vmem:[#allocation2 + $0x7d8] sm:$0xff]
    %v316 = vld [vmem:[#allocation2 + $0x7e0] sm:$0xff]
    %v317 = vld [vmem:[#allocation2 + $0x7e8] sm:$0xff]
    %v318 = vld [vmem:[#allocation2 + $0x7f0] sm:$0xff]
    %v319 = vld [vmem:[#allocation2 + $0x7f8] sm:$0xff]
    %v320 = vld [vmem:[#allocation2 + $0x800] sm:$0xff]
    %v321 = vld [vmem:[#allocation2 + $0x808] sm:$0xff]
    %v322 = vld [vmem:[#allocation2 + $0x810] sm:$0xff]
    %v323 = vld [vmem:[#allocation2 + $0x818] sm:$0xff]
    %v324 = vld [vmem:[#allocation2 + $0x820] sm:$0xff]
    %v325 = vld [vmem:[#allocation2 + $0x828] sm:$0xff]
    %v326 = vld [vmem:[#allocation2 + $0x830] sm:$0xff]
    %v327 = vld [vmem:[#allocation2 + $0x838] sm:$0xff]
    %v328 = vld [vmem:[#allocation2 + $0x840] sm:$0xff]
    %v329 = vld [vmem:[#allocation2 + $0x848] sm:$0xff]
    %v330 = vld [vmem:[#allocation2 + $0x850] sm:$0xff]
    %v331 = vld [vmem:[#allocation2 + $0x858] sm:$0xff]
    %v332 = vld [vmem:[#allocation2 + $0x860] sm:$0xff]
    %v333 = vld [vmem:[#allocation2 + $0x868] sm:$0xff]
    %v334 = vld [vmem:[#allocation2 + $0x870] sm:$0xff]
    %v335 = vld [vmem:[#allocation2 + $0x878] sm:$0xff]
    %v336 = vld [vmem:[#allocation2 + $0x880] sm:$0xff]
    %v337 = vld [vmem:[#allocation2 + $0x888] sm:$0xff]
    %v338 = vld [vmem:[#allocation2 + $0x890] sm:$0xff]
    %v339 = vld [vmem:[#allocation2 + $0x898] sm:$0xff]
    %v340 = vld [vmem:[#allocation2 + $0x8a0] sm:$0xff]
    %v341 = vld [vmem:[#allocation2 + $0x8a8] sm:$0xff]
    %v342 = vld [vmem:[#allocation2 + $0x8b0] sm:$0xff]
    %v343 = vld [vmem:[#allocation2 + $0x8b8] sm:$0xff]
    %v344 = vld [vmem:[#allocation2 + $0x8c0] sm:$0xff]
    %v345 = vld [vmem:[#allocation2 + $0x8c8] sm:$0xff]
    %v346 = vld [vmem:[#allocation2 + $0x8d0] sm:$0xff]
    %v347 = vld [vmem:[#allocation2 + $0x8d8] sm:$0xff]
    %v348 = vld [vmem:[#allocation2 + $0x8e0] sm:$0xff]
    %v349 = vld [vmem:[#allocation2 + $0x8e8] sm:$0xff]
    %v350 = vld [vmem:[#allocation2 + $0x8f0] sm:$0xff]
    %v351 = vld [vmem:[#allocation2 + $0x8f8] sm:$0xff]
    %v352 = vld [vmem:[#allocation2 + $0x900] sm:$0xff]
    %v353 = vld [vmem:[#allocation2 + $0x908] sm:$0xff]
    %v354 = vld [vmem:[#allocation2 + $0x910] sm:$0xff]
    %v355 = vld [vmem:[#allocation2 + $0x918] sm:$0xff]
    %v356 = vld [vmem:[#allocation2 + $0x920] sm:$0xff]
    %v357 = vld [vmem:[#allocation2 + $0x928] sm:$0xff]
    %v358 = vld [vmem:[#allocation2 + $0x930] sm:$0xff]
    %v359 = vld [vmem:[#allocation2 + $0x938] sm:$0xff]
    %v360 = vld [vmem:[#allocation2 + $0x940] sm:$0xff]
    %v361 = vld [vmem:[#allocation2 + $0x948] sm:$0xff]
    %v362 = vld [vmem:[#allocation2 + $0x950] sm:$0xff]
    %v363 = vld [vmem:[#allocation2 + $0x958] sm:$0xff]
    %v364 = vld [vmem:[#allocation2 + $0x960] sm:$0xff]
    %v365 = vld [vmem:[#allocation2 + $0x968] sm:$0xff]
    %v366 = vld [vmem:[#allocation2 + $0x970] sm:$0xff]
    %v367 = vld [vmem:[#allocation2 + $0x978] sm:$0xff]
    %v368 = vld [vmem:[#allocation2 + $0x980] sm:$0xff]
    %v369 = vld [vmem:[#allocation2 + $0x988] sm:$0xff]
    %v370 = vld [vmem:[#allocation2 + $0x990] sm:$0xff]
    %v371 = vld [vmem:[#allocation2 + $0x998] sm:$0xff]
    %v372 = vld [vmem:[#allocation2 + $0x9a0] sm:$0xff]
    %v373 = vld [vmem:[#allocation2 + $0x9a8] sm:$0xff]
    %v374 = vld [vmem:[#allocation2 + $0x9b0] sm:$0xff]
    %v375 = vld [vmem:[#allocation2 + $0x9b8] sm:$0xff]
    %v376 = vld [vmem:[#allocation2 + $0x9c0] sm:$0xff]
    %v377 = vld [vmem:[#allocation2 + $0x9c8] sm:$0xff]
    %v378 = vld [vmem:[#allocation2 + $0x9d0] sm:$0xff]
    %v379 = vld [vmem:[#allocation2 + $0x9d8] sm:$0xff]
    %v380 = vld [vmem:[#allocation2 + $0x9e0] sm:$0xff]
    %v381 = vld [vmem:[#allocation2 + $0x9e8] sm:$0xff]
    %v382 = vld [vmem:[#allocation2 + $0x9f0] sm:$0xff]
    %v383 = vld [vmem:[#allocation2 + $0x9f8] sm:$0xff]
    %v384 = vld [vmem:[#allocation2 + $0xa00] sm:$0xff]
    %v385 = vld [vmem:[#allocation2 + $0xa08] sm:$0xff]
    %v386 = vld [vmem:[#allocation2 + $0xa10] sm:$0xff]
    %v387 = vld [vmem:[#allocation2 + $0xa18] sm:$0xff]
    %v388 = vld [vmem:[#allocation2 + $0xa20] sm:$0xff]
    %v389 = vld [vmem:[#allocation2 + $0xa28] sm:$0xff]
    %v390 = vld [vmem:[#allocation2 + $0xa30] sm:$0xff]
    %v391 = vld [vmem:[#allocation2 + $0xa38] sm:$0xff]
    %v392 = vld [vmem:[#allocation2 + $0xa40] sm:$0xff]
    %v393 = vld [vmem:[#allocation2 + $0xa48] sm:$0xff]
    %v394 = vld [vmem:[#allocation2 + $0xa50] sm:$0xff]
    %v395 = vld [vmem:[#allocation2 + $0xa58] sm:$0xff]
    %v396 = vld [vmem:[#allocation2 + $0xa60] sm:$0xff]
    %v397 = vld [vmem:[#allocation2 + $0xa68] sm:$0xff]
    %v398 = vld [vmem:[#allocation2 + $0xa70] sm:$0xff]
    %v399 = vld [vmem:[#allocation2 + $0xa78] sm:$0xff]
    %v400 = vld [vmem:[#allocation2 + $0xa80] sm:$0xff]
    %v401 = vld [vmem:[#allocation2 + $0xa88] sm:$0xff]
    %v402 = vld [vmem:[#allocation2 + $0xa90] sm:$0xff]
    %v403 = vld [vmem:[#allocation2 + $0xa98] sm:$0xff]
    %v404 = vld [vmem:[#allocation2 + $0xaa0] sm:$0xff]
    %v405 = vld [vmem:[#allocation2 + $0xaa8] sm:$0xff]
    %v406 = vld [vmem:[#allocation2 + $0xab0] sm:$0xff]
    %v407 = vld [vmem:[#allocation2 + $0xab8] sm:$0xff]
    %v408 = vld [vmem:[#allocation2 + $0xac0] sm:$0xff]
    %v409 = vld [vmem:[#allocation2 + $0xac8] sm:$0xff]
    %v410 = vld [vmem:[#allocation2 + $0xad0] sm:$0xff]
    %v411 = vld [vmem:[#allocation2 + $0xad8] sm:$0xff]
    %v412 = vld [vmem:[#allocation2 + $0xae0] sm:$0xff]
    %v413 = vld [vmem:[#allocation2 + $0xae8] sm:$0xff]
    %v414 = vld [vmem:[#allocation2 + $0xaf0] sm:$0xff]
    %v415 = vld [vmem:[#allocation2 + $0xaf8] sm:$0xff]
    %v416 = vld [vmem:[#allocation2 + $0xb00] sm:$0xff]
    %v417 = vld [vmem:[#allocation2 + $0xb08] sm:$0xff]
    %v418 = vld [vmem:[#allocation2 + $0xb10] sm:$0xff]
    %v419 = vld [vmem:[#allocation2 + $0xb18] sm:$0xff]
    %v420 = vld [vmem:[#allocation2 + $0xb20] sm:$0xff]
    %v421 = vld [vmem:[#allocation2 + $0xb28] sm:$0xff]
    %v422 = vld [vmem:[#allocation2 + $0xb30] sm:$0xff]
    %v423 = vld [vmem:[#allocation2 + $0xb38] sm:$0xff]
    %v424 = vld [vmem:[#allocation2 + $0xb40] sm:$0xff]
    %v425 = vld [vmem:[#allocation2 + $0xb48] sm:$0xff]
    %v426 = vld [vmem:[#allocation2 + $0xb50] sm:$0xff]
    %v427 = vld [vmem:[#allocation2 + $0xb58] sm:$0xff]
    %v428 = vld [vmem:[#allocation2 + $0xb60] sm:$0xff]
    %v429 = vld [vmem:[#allocation2 + $0xb68] sm:$0xff]
    %v430 = vld [vmem:[#allocation2 + $0xb70] sm:$0xff]
    %v431 = vld [vmem:[#allocation2 + $0xb78] sm:$0xff]
    %v432 = vld [vmem:[#allocation2 + $0xb80] sm:$0xff]
    %v433 = vld [vmem:[#allocation2 + $0xb88] sm:$0xff]
    %v434 = vld [vmem:[#allocation2 + $0xb90] sm:$0xff]
    %v435 = vld [vmem:[#allocation2 + $0xb98] sm:$0xff]
    %v436 = vld [vmem:[#allocation2 + $0xba0] sm:$0xff]
    %v437 = vld [vmem:[#allocation2 + $0xba8] sm:$0xff]
    %v438 = vld [vmem:[#allocation2 + $0xbb0] sm:$0xff]
    %v439 = vld [vmem:[#allocation2 + $0xbb8] sm:$0xff]
    %v440 = vld [vmem:[#allocation2 + $0xbc0] sm:$0xff]
    %v441 = vld [vmem:[#allocation2 + $0xbc8] sm:$0xff]
    %v442 = vld [vmem:[#allocation2 + $0xbd0] sm:$0xff]
    %v443 = vld [vmem:[#allocation2 + $0xbd8] sm:$0xff]
    %v444 = vld [vmem:[#allocation2 + $0xbe0] sm:$0xff]
    %v445 = vld [vmem:[#allocation2 + $0xbe8] sm:$0xff]
    %v446 = vld [vmem:[#allocation2 + $0xbf0] sm:$0xff]
    %v447 = vld [vmem:[#allocation2 + $0xbf8] sm:$0xff]
    %v448 = vld [vmem:[#allocation2 + $0xc00] sm:$0xff]
    %v449 = vld [vmem:[#allocation2 + $0xc08] sm:$0xff]
    %v450 = vld [vmem:[#allocation2 + $0xc10] sm:$0xff]
    %v451 = vld [vmem:[#allocation2 + $0xc18] sm:$0xff]
    %v452 = vld [vmem:[#allocation2 + $0xc20] sm:$0xff]
    %v453 = vld [vmem:[#allocation2 + $0xc28] sm:$0xff]
    %v454 = vld [vmem:[#allocation2 + $0xc30] sm:$0xff]
    %v455 = vld [vmem:[#allocation2 + $0xc38] sm:$0xff]
    %v456 = vld [vmem:[#allocation2 + $0xc40] sm:$0xff]
    %v457 = vld [vmem:[#allocation2 + $0xc48] sm:$0xff]
    %v458 = vld [vmem:[#allocation2 + $0xc50] sm:$0xff]
    %v459 = vld [vmem:[#allocation2 + $0xc58] sm:$0xff]
    %v460 = vld [vmem:[#allocation2 + $0xc60] sm:$0xff]
    %v461 = vld [vmem:[#allocation2 + $0xc68] sm:$0xff]
    %v462 = vld [vmem:[#allocation2 + $0xc70] sm:$0xff]
    %v463 = vld [vmem:[#allocation2 + $0xc78] sm:$0xff]
    %v464 = vld [vmem:[#allocation2 + $0xc80] sm:$0xff]
    %v465 = vld [vmem:[#allocation2 + $0xc88] sm:$0xff]
    %v466 = vld [vmem:[#allocation2 + $0xc90] sm:$0xff]
    %v467 = vld [vmem:[#allocation2 + $0xc98] sm:$0xff]
    %v468 = vld [vmem:[#allocation2 + $0xca0] sm:$0xff]
    %v469 = vld [vmem:[#allocation2 + $0xca8] sm:$0xff]
    %v470 = vld [vmem:[#allocation2 + $0xcb0] sm:$0xff]
    %v471 = vld [vmem:[#allocation2 + $0xcb8] sm:$0xff]
    %v472 = vld [vmem:[#allocation2 + $0xcc0] sm:$0xff]
    %v473 = vld [vmem:[#allocation2 + $0xcc8] sm:$0xff]
    %v474 = vld [vmem:[#allocation2 + $0xcd0] sm:$0xff]
    %v475 = vld [vmem:[#allocation2 + $0xcd8] sm:$0xff]
    %v476 = vld [vmem:[#allocation2 + $0xce0] sm:$0xff]
    %v477 = vld [vmem:[#allocation2 + $0xce8] sm:$0xff]
    %v478 = vld [vmem:[#allocation2 + $0xcf0] sm:$0xff]
    %v479 = vld [vmem:[#allocation2 + $0xcf8] sm:$0xff]
    %v480 = vld [vmem:[#allocation2 + $0xd00] sm:$0xff]
    %v481 = vld [vmem:[#allocation2 + $0xd08] sm:$0xff]
    %v482 = vld [vmem:[#allocation2 + $0xd10] sm:$0xff]
    %v483 = vld [vmem:[#allocation2 + $0xd18] sm:$0xff]
    %v484 = vld [vmem:[#allocation2 + $0xd20] sm:$0xff]
    %v485 = vld [vmem:[#allocation2 + $0xd28] sm:$0xff]
    %v486 = vld [vmem:[#allocation2 + $0xd30] sm:$0xff]
    %v487 = vld [vmem:[#allocation2 + $0xd38] sm:$0xff]
    %v488 = vld [vmem:[#allocation2 + $0xd40] sm:$0xff]
    %v489 = vld [vmem:[#allocation2 + $0xd48] sm:$0xff]
    %v490 = vld [vmem:[#allocation2 + $0xd50] sm:$0xff]
    %v491 = vld [vmem:[#allocation2 + $0xd58] sm:$0xff]
    %v492 = vld [vmem:[#allocation2 + $0xd60] sm:$0xff]
    %v493 = vld [vmem:[#allocation2 + $0xd68] sm:$0xff]
    %v494 = vld [vmem:[#allocation2 + $0xd70] sm:$0xff]
    %v495 = vld [vmem:[#allocation2 + $0xd78] sm:$0xff]
    %v496 = vld [vmem:[#allocation2 + $0xd80] sm:$0xff]
    %v497 = vld [vmem:[#allocation2 + $0xd88] sm:$0xff]
    %v498 = vld [vmem:[#allocation2 + $0xd90] sm:$0xff]
    %v499 = vld [vmem:[#allocation2 + $0xd98] sm:$0xff]
    %v500 = vld [vmem:[#allocation2 + $0xda0] sm:$0xff]
    %v501 = vld [vmem:[#allocation2 + $0xda8] sm:$0xff]
    %v502 = vld [vmem:[#allocation2 + $0xdb0] sm:$0xff]
    %v503 = vld [vmem:[#allocation2 + $0xdb8] sm:$0xff]
    %v504 = vld [vmem:[#allocation2 + $0xdc0] sm:$0xff]
    %v505 = vld [vmem:[#allocation2 + $0xdc8] sm:$0xff]
    %v506 = vld [vmem:[#allocation2 + $0xdd0] sm:$0xff]
    %v507 = vld [vmem:[#allocation2 + $0xdd8] sm:$0xff]
    %v508 = vld [vmem:[#allocation2 + $0xde0] sm:$0xff]
    %v509 = vld [vmem:[#allocation2 + $0xde8] sm:$0xff]
    %v510 = vld [vmem:[#allocation2 + $0xdf0] sm:$0xff]
    %v511 = vld [vmem:[#allocation2 + $0xdf8] sm:$0xff]
    %v512 = vld [vmem:[#allocation2 + $0xe00] sm:$0xff]
    %v513 = vld [vmem:[#allocation2 + $0xe08] sm:$0xff]
    %v514 = vld [vmem:[#allocation2 + $0xe10] sm:$0xff]
    %v515 = vld [vmem:[#allocation2 + $0xe18] sm:$0xff]
    %v516 = vld [vmem:[#allocation2 + $0xe20] sm:$0xff]
    %v517 = vld [vmem:[#allocation2 + $0xe28] sm:$0xff]
    %v518 = vld [vmem:[#allocation2 + $0xe30] sm:$0xff]
    %v519 = vld [vmem:[#allocation2 + $0xe38] sm:$0xff]
    %v520 = vld [vmem:[#allocation2 + $0xe40] sm:$0xff]
    %v521 = vld [vmem:[#allocation2 + $0xe48] sm:$0xff]
    %v522 = vld [vmem:[#allocation2 + $0xe50] sm:$0xff]
    %v523 = vld [vmem:[#allocation2 + $0xe58] sm:$0xff]
    %v524 = vld [vmem:[#allocation2 + $0xe60] sm:$0xff]
    %v525 = vld [vmem:[#allocation2 + $0xe68] sm:$0xff]
    %v526 = vld [vmem:[#allocation2 + $0xe70] sm:$0xff]
    %v527 = vld [vmem:[#allocation2 + $0xe78] sm:$0xff]
    %v528 = vld [vmem:[#allocation2 + $0xe80] sm:$0xff]
    %v529 = vld [vmem:[#allocation2 + $0xe88] sm:$0xff]
    %v530 = vld [vmem:[#allocation2 + $0xe90] sm:$0xff]
    %v531 = vld [vmem:[#allocation2 + $0xe98] sm:$0xff]
    %v532 = vld [vmem:[#allocation2 + $0xea0] sm:$0xff]
    %v533 = vld [vmem:[#allocation2 + $0xea8] sm:$0xff]
    %v534 = vld [vmem:[#allocation2 + $0xeb0] sm:$0xff]
    %v535 = vld [vmem:[#allocation2 + $0xeb8] sm:$0xff]
    %v536 = vld [vmem:[#allocation2 + $0xec0] sm:$0xff]
    %v537 = vld [vmem:[#allocation2 + $0xec8] sm:$0xff]
    %v538 = vld [vmem:[#allocation2 + $0xed0] sm:$0xff]
    %v539 = vld [vmem:[#allocation2 + $0xed8] sm:$0xff]
    %v540 = vld [vmem:[#allocation2 + $0xee0] sm:$0xff]
    %v541 = vld [vmem:[#allocation2 + $0xee8] sm:$0xff]
    %v542 = vld [vmem:[#allocation2 + $0xef0] sm:$0xff]
    %v543 = vld [vmem:[#allocation2 + $0xef8] sm:$0xff]
    %v544 = vld [vmem:[#allocation2 + $0xf00] sm:$0xff]
    %v545 = vld [vmem:[#allocation2 + $0xf08] sm:$0xff]
    %v546 = vld [vmem:[#allocation2 + $0xf10] sm:$0xff]
    %v547 = vld [vmem:[#allocation2 + $0xf18] sm:$0xff]
    %v548 = vld [vmem:[#allocation2 + $0xf20] sm:$0xff]
    %v549 = vld [vmem:[#allocation2 + $0xf28] sm:$0xff]
    %v550 = vld [vmem:[#allocation2 + $0xf30] sm:$0xff]
    %v551 = vld [vmem:[#allocation2 + $0xf38] sm:$0xff]
    %v552 = vld [vmem:[#allocation2 + $0xf40] sm:$0xff]
    %v553 = vld [vmem:[#allocation2 + $0xf48] sm:$0xff]
    %v554 = vld [vmem:[#allocation2 + $0xf50] sm:$0xff]
    %v555 = vld [vmem:[#allocation2 + $0xf58] sm:$0xff]
    %v556 = vld [vmem:[#allocation2 + $0xf60] sm:$0xff]
    %v557 = vld [vmem:[#allocation2 + $0xf68] sm:$0xff]
    %v558 = vld [vmem:[#allocation2 + $0xf70] sm:$0xff]
    %v559 = vld [vmem:[#allocation2 + $0xf78] sm:$0xff]
    %v560 = vld [vmem:[#allocation2 + $0xf80] sm:$0xff]
    %v561 = vld [vmem:[#allocation2 + $0xf88] sm:$0xff]
    %v562 = vld [vmem:[#allocation2 + $0xf90] sm:$0xff]
    %v563 = vld [vmem:[#allocation2 + $0xf98] sm:$0xff]
    %v564 = vld [vmem:[#allocation2 + $0xfa0] sm:$0xff]
    %v565 = vld [vmem:[#allocation2 + $0xfa8] sm:$0xff]
    %v566 = vld [vmem:[#allocation2 + $0xfb0] sm:$0xff]
    %v567 = vld [vmem:[#allocation2 + $0xfb8] sm:$0xff]
    %v568 = vld [vmem:[#allocation2 + $0xfc0] sm:$0xff]
    %v569 = vld [vmem:[#allocation2 + $0xfc8] sm:$0xff]
    %v570 = vld [vmem:[#allocation2 + $0xfd0] sm:$0xff]
    %v571 = vld [vmem:[#allocation2 + $0xfd8] sm:$0xff]
    %v572 = vld [vmem:[#allocation2 + $0xfe0] sm:$0xff]
    %v573 = vld [vmem:[#allocation2 + $0xfe8] sm:$0xff]
    %v574 = vld [vmem:[#allocation2 + $0xff0] sm:$0xff]
    %v575 = vld [vmem:[#allocation2 + $0xff8] sm:$0xff]
    %v576 = vld [vmem:[#allocation4] sm:$0xff]
    %v578 = vlaneseq
    %v579 = vshrl.u32 %v578, 7
    %v580 = vsub.s32 0, %v579
    %v581 = vrot.slane %v576, %v580
    %v582 = vlaneseq
    %v583 = vshrl.u32 %v582, 7
    %v584 = vsub.s32 1, %v583
    %v585 = vrot.slane %v576, %v584
    %v586 = vlaneseq
    %v587 = vshrl.u32 %v586, 7
    %v588 = vsub.s32 2, %v587
    %v589 = vrot.slane %v576, %v588
    %v590 = vlaneseq
    %v591 = vshrl.u32 %v590, 7
    %v592 = vsub.s32 3, %v591
    %v593 = vrot.slane %v576, %v592
    %v594 = vlaneseq
    %v595 = vshrl.u32 %v594, 7
    %v596 = vsub.s32 4, %v595
    %v597 = vrot.slane %v576, %v596
    %v598 = vlaneseq
    %v599 = vshrl.u32 %v598, 7
    %v600 = vsub.s32 5, %v599
    %v601 = vrot.slane %v576, %v600
    %v602 = vlaneseq
    %v603 = vshrl.u32 %v602, 7
    %v604 = vsub.s32 6, %v603
    %v605 = vrot.slane %v576, %v604
    %v606 = vlaneseq
    %v607 = vshrl.u32 %v606, 7
    %v608 = vsub.s32 7, %v607
    %v609 = vrot.slane %v576, %v608
    %v1130 = vunpack.c.l.b16 %v64
    %v1131 = vunpack.c.h.b16 %v64
    %v1132 = vunpack.c.l.b16 %v65
    %v1133 = vunpack.c.h.b16 %v65
    %v1134 = vunpack.c.l.b16 %v66
    %v1135 = vunpack.c.h.b16 %v66
    %v1136 = vunpack.c.l.b16 %v67
    %v1137 = vunpack.c.h.b16 %v67
    %v1138 = vunpack.c.l.b16 %v68
    %v1139 = vunpack.c.h.b16 %v68
    %v1140 = vunpack.c.l.b16 %v69
    %v1141 = vunpack.c.h.b16 %v69
    %v1142 = vunpack.c.l.b16 %v70
    %v1143 = vunpack.c.h.b16 %v70
    %v1144 = vunpack.c.l.b16 %v71
    %v1145 = vunpack.c.h.b16 %v71
    %v1146 = vunpack.c.l.b16 %v72
    %v1147 = vunpack.c.h.b16 %v72
    %v1148 = vunpack.c.l.b16 %v73
    %v1149 = vunpack.c.h.b16 %v73
    %v1150 = vunpack.c.l.b16 %v74
    %v1151 = vunpack.c.h.b16 %v74
    %v1152 = vunpack.c.l.b16 %v75
    %v1153 = vunpack.c.h.b16 %v75
    %v1154 = vunpack.c.l.b16 %v76
    %v1155 = vunpack.c.h.b16 %v76
    %v1156 = vunpack.c.l.b16 %v77
    %v1157 = vunpack.c.h.b16 %v77
    %v1158 = vunpack.c.l.b16 %v78
    %v1159 = vunpack.c.h.b16 %v78
    %v1160 = vunpack.c.l.b16 %v79
    %v1161 = vunpack.c.h.b16 %v79
    %v1162 = vunpack.c.l.b16 %v80
    %v1163 = vunpack.c.h.b16 %v80
    %v1164 = vunpack.c.l.b16 %v81
    %v1165 = vunpack.c.h.b16 %v81
    %v1166 = vunpack.c.l.b16 %v82
    %v1167 = vunpack.c.h.b16 %v82
    %v1168 = vunpack.c.l.b16 %v83
    %v1169 = vunpack.c.h.b16 %v83
    %v1170 = vunpack.c.l.b16 %v84
    %v1171 = vunpack.c.h.b16 %v84
    %v1172 = vunpack.c.l.b16 %v85
    %v1173 = vunpack.c.h.b16 %v85
    %v1174 = vunpack.c.l.b16 %v86
    %v1175 = vunpack.c.h.b16 %v86
    %v1176 = vunpack.c.l.b16 %v87
    %v1177 = vunpack.c.h.b16 %v87
    %v1178 = vunpack.c.l.b16 %v88
    %v1179 = vunpack.c.h.b16 %v88
    %v1180 = vunpack.c.l.b16 %v89
    %v1181 = vunpack.c.h.b16 %v89
    %v1182 = vunpack.c.l.b16 %v90
    %v1183 = vunpack.c.h.b16 %v90
    %v1184 = vunpack.c.l.b16 %v91
    %v1185 = vunpack.c.h.b16 %v91
    %v1186 = vunpack.c.l.b16 %v92
    %v1187 = vunpack.c.h.b16 %v92
    %v1188 = vunpack.c.l.b16 %v93
    %v1189 = vunpack.c.h.b16 %v93
    %v1190 = vunpack.c.l.b16 %v94
    %v1191 = vunpack.c.h.b16 %v94
    %v1192 = vunpack.c.l.b16 %v95
    %v1193 = vunpack.c.h.b16 %v95
    %v1194 = vunpack.c.l.b16 %v96
    %v1195 = vunpack.c.h.b16 %v96
    %v1196 = vunpack.c.l.b16 %v97
    %v1197 = vunpack.c.h.b16 %v97
    %v1198 = vunpack.c.l.b16 %v98
    %v1199 = vunpack.c.h.b16 %v98
    %v1200 = vunpack.c.l.b16 %v99
    %v1201 = vunpack.c.h.b16 %v99
    %v1202 = vunpack.c.l.b16 %v100
    %v1203 = vunpack.c.h.b16 %v100
    %v1204 = vunpack.c.l.b16 %v101
    %v1205 = vunpack.c.h.b16 %v101
    %v1206 = vunpack.c.l.b16 %v102
    %v1207 = vunpack.c.h.b16 %v102
    %v1208 = vunpack.c.l.b16 %v103
    %v1209 = vunpack.c.h.b16 %v103
    %v1210 = vunpack.c.l.b16 %v104
    %v1211 = vunpack.c.h.b16 %v104
    %v1212 = vunpack.c.l.b16 %v105
    %v1213 = vunpack.c.h.b16 %v105
    %v1214 = vunpack.c.l.b16 %v106
    %v1215 = vunpack.c.h.b16 %v106
    %v1216 = vunpack.c.l.b16 %v107
    %v1217 = vunpack.c.h.b16 %v107
    %v1218 = vunpack.c.l.b16 %v108
    %v1219 = vunpack.c.h.b16 %v108
    %v1220 = vunpack.c.l.b16 %v109
    %v1221 = vunpack.c.h.b16 %v109
    %v1222 = vunpack.c.l.b16 %v110
    %v1223 = vunpack.c.h.b16 %v110
    %v1224 = vunpack.c.l.b16 %v111
    %v1225 = vunpack.c.h.b16 %v111
    %v1226 = vunpack.c.l.b16 %v112
    %v1227 = vunpack.c.h.b16 %v112
    %v1228 = vunpack.c.l.b16 %v113
    %v1229 = vunpack.c.h.b16 %v113
    %v1230 = vunpack.c.l.b16 %v114
    %v1231 = vunpack.c.h.b16 %v114
    %v1232 = vunpack.c.l.b16 %v115
    %v1233 = vunpack.c.h.b16 %v115
    %v1234 = vunpack.c.l.b16 %v116
    %v1235 = vunpack.c.h.b16 %v116
    %v1236 = vunpack.c.l.b16 %v117
    %v1237 = vunpack.c.h.b16 %v117
    %v1238 = vunpack.c.l.b16 %v118
    %v1239 = vunpack.c.h.b16 %v118
    %v1240 = vunpack.c.l.b16 %v119
    %v1241 = vunpack.c.h.b16 %v119
    %v1242 = vunpack.c.l.b16 %v120
    %v1243 = vunpack.c.h.b16 %v120
    %v1244 = vunpack.c.l.b16 %v121
    %v1245 = vunpack.c.h.b16 %v121
    %v1246 = vunpack.c.l.b16 %v122
    %v1247 = vunpack.c.h.b16 %v122
    %v1248 = vunpack.c.l.b16 %v123
    %v1249 = vunpack.c.h.b16 %v123
    %v1250 = vunpack.c.l.b16 %v124
    %v1251 = vunpack.c.h.b16 %v124
    %v1252 = vunpack.c.l.b16 %v125
    %v1253 = vunpack.c.h.b16 %v125
    %v1254 = vunpack.c.l.b16 %v126
    %v1255 = vunpack.c.h.b16 %v126
    %v1256 = vunpack.c.l.b16 %v127
    %v1257 = vunpack.c.h.b16 %v127
    %v1258 = vunpack.c.l.b16 %v128
    %v1259 = vunpack.c.h.b16 %v128
    %v1260 = vunpack.c.l.b16 %v129
    %v1261 = vunpack.c.h.b16 %v129
    %v1262 = vunpack.c.l.b16 %v130
    %v1263 = vunpack.c.h.b16 %v130
    %v1264 = vunpack.c.l.b16 %v131
    %v1265 = vunpack.c.h.b16 %v131
    %v1266 = vunpack.c.l.b16 %v132
    %v1267 = vunpack.c.h.b16 %v132
    %v1268 = vunpack.c.l.b16 %v133
    %v1269 = vunpack.c.h.b16 %v133
    %v1270 = vunpack.c.l.b16 %v134
    %v1271 = vunpack.c.h.b16 %v134
    %v1272 = vunpack.c.l.b16 %v135
    %v1273 = vunpack.c.h.b16 %v135
    %v1274 = vunpack.c.l.b16 %v136
    %v1275 = vunpack.c.h.b16 %v136
    %v1276 = vunpack.c.l.b16 %v137
    %v1277 = vunpack.c.h.b16 %v137
    %v1278 = vunpack.c.l.b16 %v138
    %v1279 = vunpack.c.h.b16 %v138
    %v1280 = vunpack.c.l.b16 %v139
    %v1281 = vunpack.c.h.b16 %v139
    %v1282 = vunpack.c.l.b16 %v140
    %v1283 = vunpack.c.h.b16 %v140
    %v1284 = vunpack.c.l.b16 %v141
    %v1285 = vunpack.c.h.b16 %v141
    %v1286 = vunpack.c.l.b16 %v142
    %v1287 = vunpack.c.h.b16 %v142
    %v1288 = vunpack.c.l.b16 %v143
    %v1289 = vunpack.c.h.b16 %v143
    %v1290 = vunpack.c.l.b16 %v144
    %v1291 = vunpack.c.h.b16 %v144
    %v1292 = vunpack.c.l.b16 %v145
    %v1293 = vunpack.c.h.b16 %v145
    %v1294 = vunpack.c.l.b16 %v146
    %v1295 = vunpack.c.h.b16 %v146
    %v1296 = vunpack.c.l.b16 %v147
    %v1297 = vunpack.c.h.b16 %v147
    %v1298 = vunpack.c.l.b16 %v148
    %v1299 = vunpack.c.h.b16 %v148
    %v1300 = vunpack.c.l.b16 %v149
    %v1301 = vunpack.c.h.b16 %v149
    %v1302 = vunpack.c.l.b16 %v150
    %v1303 = vunpack.c.h.b16 %v150
    %v1304 = vunpack.c.l.b16 %v151
    %v1305 = vunpack.c.h.b16 %v151
    %v1306 = vunpack.c.l.b16 %v152
    %v1307 = vunpack.c.h.b16 %v152
    %v1308 = vunpack.c.l.b16 %v153
    %v1309 = vunpack.c.h.b16 %v153
    %v1310 = vunpack.c.l.b16 %v154
    %v1311 = vunpack.c.h.b16 %v154
    %v1312 = vunpack.c.l.b16 %v155
    %v1313 = vunpack.c.h.b16 %v155
    %v1314 = vunpack.c.l.b16 %v156
    %v1315 = vunpack.c.h.b16 %v156
    %v1316 = vunpack.c.l.b16 %v157
    %v1317 = vunpack.c.h.b16 %v157
    %v1318 = vunpack.c.l.b16 %v158
    %v1319 = vunpack.c.h.b16 %v158
    %v1320 = vunpack.c.l.b16 %v159
    %v1321 = vunpack.c.h.b16 %v159
    %v1322 = vunpack.c.l.b16 %v160
    %v1323 = vunpack.c.h.b16 %v160
    %v1324 = vunpack.c.l.b16 %v161
    %v1325 = vunpack.c.h.b16 %v161
    %v1326 = vunpack.c.l.b16 %v162
    %v1327 = vunpack.c.h.b16 %v162
    %v1328 = vunpack.c.l.b16 %v163
    %v1329 = vunpack.c.h.b16 %v163
    %v1330 = vunpack.c.l.b16 %v164
    %v1331 = vunpack.c.h.b16 %v164
    %v1332 = vunpack.c.l.b16 %v165
    %v1333 = vunpack.c.h.b16 %v165
    %v1334 = vunpack.c.l.b16 %v166
    %v1335 = vunpack.c.h.b16 %v166
    %v1336 = vunpack.c.l.b16 %v167
    %v1337 = vunpack.c.h.b16 %v167
    %v1338 = vunpack.c.l.b16 %v168
    %v1339 = vunpack.c.h.b16 %v168
    %v1340 = vunpack.c.l.b16 %v169
    %v1341 = vunpack.c.h.b16 %v169
    %v1342 = vunpack.c.l.b16 %v170
    %v1343 = vunpack.c.h.b16 %v170
    %v1344 = vunpack.c.l.b16 %v171
    %v1345 = vunpack.c.h.b16 %v171
    %v1346 = vunpack.c.l.b16 %v172
    %v1347 = vunpack.c.h.b16 %v172
    %v1348 = vunpack.c.l.b16 %v173
    %v1349 = vunpack.c.h.b16 %v173
    %v1350 = vunpack.c.l.b16 %v174
    %v1351 = vunpack.c.h.b16 %v174
    %v1352 = vunpack.c.l.b16 %v175
    %v1353 = vunpack.c.h.b16 %v175
    %v1354 = vunpack.c.l.b16 %v176
    %v1355 = vunpack.c.h.b16 %v176
    %v1356 = vunpack.c.l.b16 %v177
    %v1357 = vunpack.c.h.b16 %v177
    %v1358 = vunpack.c.l.b16 %v178
    %v1359 = vunpack.c.h.b16 %v178
    %v1360 = vunpack.c.l.b16 %v179
    %v1361 = vunpack.c.h.b16 %v179
    %v1362 = vunpack.c.l.b16 %v180
    %v1363 = vunpack.c.h.b16 %v180
    %v1364 = vunpack.c.l.b16 %v181
    %v1365 = vunpack.c.h.b16 %v181
    %v1366 = vunpack.c.l.b16 %v182
    %v1367 = vunpack.c.h.b16 %v182
    %v1368 = vunpack.c.l.b16 %v183
    %v1369 = vunpack.c.h.b16 %v183
    %v1370 = vunpack.c.l.b16 %v184
    %v1371 = vunpack.c.h.b16 %v184
    %v1372 = vunpack.c.l.b16 %v185
    %v1373 = vunpack.c.h.b16 %v185
    %v1374 = vunpack.c.l.b16 %v186
    %v1375 = vunpack.c.h.b16 %v186
    %v1376 = vunpack.c.l.b16 %v187
    %v1377 = vunpack.c.h.b16 %v187
    %v1378 = vunpack.c.l.b16 %v188
    %v1379 = vunpack.c.h.b16 %v188
    %v1380 = vunpack.c.l.b16 %v189
    %v1381 = vunpack.c.h.b16 %v189
    %v1382 = vunpack.c.l.b16 %v190
    %v1383 = vunpack.c.h.b16 %v190
    %v1384 = vunpack.c.l.b16 %v191
    %v1385 = vunpack.c.h.b16 %v191
    %v1386 = vunpack.c.l.b16 %v192
    %v1387 = vunpack.c.h.b16 %v192
    %v1388 = vunpack.c.l.b16 %v193
    %v1389 = vunpack.c.h.b16 %v193
    %v1390 = vunpack.c.l.b16 %v194
    %v1391 = vunpack.c.h.b16 %v194
    %v1392 = vunpack.c.l.b16 %v195
    %v1393 = vunpack.c.h.b16 %v195
    %v1394 = vunpack.c.l.b16 %v196
    %v1395 = vunpack.c.h.b16 %v196
    %v1396 = vunpack.c.l.b16 %v197
    %v1397 = vunpack.c.h.b16 %v197
    %v1398 = vunpack.c.l.b16 %v198
    %v1399 = vunpack.c.h.b16 %v198
    %v1400 = vunpack.c.l.b16 %v199
    %v1401 = vunpack.c.h.b16 %v199
    %v1402 = vunpack.c.l.b16 %v200
    %v1403 = vunpack.c.h.b16 %v200
    %v1404 = vunpack.c.l.b16 %v201
    %v1405 = vunpack.c.h.b16 %v201
    %v1406 = vunpack.c.l.b16 %v202
    %v1407 = vunpack.c.h.b16 %v202
    %v1408 = vunpack.c.l.b16 %v203
    %v1409 = vunpack.c.h.b16 %v203
    %v1410 = vunpack.c.l.b16 %v204
    %v1411 = vunpack.c.h.b16 %v204
    %v1412 = vunpack.c.l.b16 %v205
    %v1413 = vunpack.c.h.b16 %v205
    %v1414 = vunpack.c.l.b16 %v206
    %v1415 = vunpack.c.h.b16 %v206
    %v1416 = vunpack.c.l.b16 %v207
    %v1417 = vunpack.c.h.b16 %v207
    %v1418 = vunpack.c.l.b16 %v208
    %v1419 = vunpack.c.h.b16 %v208
    %v1420 = vunpack.c.l.b16 %v209
    %v1421 = vunpack.c.h.b16 %v209
    %v1422 = vunpack.c.l.b16 %v210
    %v1423 = vunpack.c.h.b16 %v210
    %v1424 = vunpack.c.l.b16 %v211
    %v1425 = vunpack.c.h.b16 %v211
    %v1426 = vunpack.c.l.b16 %v212
    %v1427 = vunpack.c.h.b16 %v212
    %v1428 = vunpack.c.l.b16 %v213
    %v1429 = vunpack.c.h.b16 %v213
    %v1430 = vunpack.c.l.b16 %v214
    %v1431 = vunpack.c.h.b16 %v214
    %v1432 = vunpack.c.l.b16 %v215
    %v1433 = vunpack.c.h.b16 %v215
    %v1434 = vunpack.c.l.b16 %v216
    %v1435 = vunpack.c.h.b16 %v216
    %v1436 = vunpack.c.l.b16 %v217
    %v1437 = vunpack.c.h.b16 %v217
    %v1438 = vunpack.c.l.b16 %v218
    %v1439 = vunpack.c.h.b16 %v218
    %v1440 = vunpack.c.l.b16 %v219
    %v1441 = vunpack.c.h.b16 %v219
    %v1442 = vunpack.c.l.b16 %v220
    %v1443 = vunpack.c.h.b16 %v220
    %v1444 = vunpack.c.l.b16 %v221
    %v1445 = vunpack.c.h.b16 %v221
    %v1446 = vunpack.c.l.b16 %v222
    %v1447 = vunpack.c.h.b16 %v222
    %v1448 = vunpack.c.l.b16 %v223
    %v1449 = vunpack.c.h.b16 %v223
    %v1450 = vunpack.c.l.b16 %v224
    %v1451 = vunpack.c.h.b16 %v224
    %v1452 = vunpack.c.l.b16 %v225
    %v1453 = vunpack.c.h.b16 %v225
    %v1454 = vunpack.c.l.b16 %v226
    %v1455 = vunpack.c.h.b16 %v226
    %v1456 = vunpack.c.l.b16 %v227
    %v1457 = vunpack.c.h.b16 %v227
    %v1458 = vunpack.c.l.b16 %v228
    %v1459 = vunpack.c.h.b16 %v228
    %v1460 = vunpack.c.l.b16 %v229
    %v1461 = vunpack.c.h.b16 %v229
    %v1462 = vunpack.c.l.b16 %v230
    %v1463 = vunpack.c.h.b16 %v230
    %v1464 = vunpack.c.l.b16 %v231
    %v1465 = vunpack.c.h.b16 %v231
    %v1466 = vunpack.c.l.b16 %v232
    %v1467 = vunpack.c.h.b16 %v232
    %v1468 = vunpack.c.l.b16 %v233
    %v1469 = vunpack.c.h.b16 %v233
    %v1470 = vunpack.c.l.b16 %v234
    %v1471 = vunpack.c.h.b16 %v234
    %v1472 = vunpack.c.l.b16 %v235
    %v1473 = vunpack.c.h.b16 %v235
    %v1474 = vunpack.c.l.b16 %v236
    %v1475 = vunpack.c.h.b16 %v236
    %v1476 = vunpack.c.l.b16 %v237
    %v1477 = vunpack.c.h.b16 %v237
    %v1478 = vunpack.c.l.b16 %v238
    %v1479 = vunpack.c.h.b16 %v238
    %v1480 = vunpack.c.l.b16 %v239
    %v1481 = vunpack.c.h.b16 %v239
    %v1482 = vunpack.c.l.b16 %v240
    %v1483 = vunpack.c.h.b16 %v240
    %v1484 = vunpack.c.l.b16 %v241
    %v1485 = vunpack.c.h.b16 %v241
    %v1486 = vunpack.c.l.b16 %v242
    %v1487 = vunpack.c.h.b16 %v242
    %v1488 = vunpack.c.l.b16 %v243
    %v1489 = vunpack.c.h.b16 %v243
    %v1490 = vunpack.c.l.b16 %v244
    %v1491 = vunpack.c.h.b16 %v244
    %v1492 = vunpack.c.l.b16 %v245
    %v1493 = vunpack.c.h.b16 %v245
    %v1494 = vunpack.c.l.b16 %v246
    %v1495 = vunpack.c.h.b16 %v246
    %v1496 = vunpack.c.l.b16 %v247
    %v1497 = vunpack.c.h.b16 %v247
    %v1498 = vunpack.c.l.b16 %v248
    %v1499 = vunpack.c.h.b16 %v248
    %v1500 = vunpack.c.l.b16 %v249
    %v1501 = vunpack.c.h.b16 %v249
    %v1502 = vunpack.c.l.b16 %v250
    %v1503 = vunpack.c.h.b16 %v250
    %v1504 = vunpack.c.l.b16 %v251
    %v1505 = vunpack.c.h.b16 %v251
    %v1506 = vunpack.c.l.b16 %v252
    %v1507 = vunpack.c.h.b16 %v252
    %v1508 = vunpack.c.l.b16 %v253
    %v1509 = vunpack.c.h.b16 %v253
    %v1510 = vunpack.c.l.b16 %v254
    %v1511 = vunpack.c.h.b16 %v254
    %v1512 = vunpack.c.l.b16 %v255
    %v1513 = vunpack.c.h.b16 %v255
    %v1514 = vunpack.c.l.b16 %v256
    %v1515 = vunpack.c.h.b16 %v256
    %v1516 = vunpack.c.l.b16 %v257
    %v1517 = vunpack.c.h.b16 %v257
    %v1518 = vunpack.c.l.b16 %v258
    %v1519 = vunpack.c.h.b16 %v258
    %v1520 = vunpack.c.l.b16 %v259
    %v1521 = vunpack.c.h.b16 %v259
    %v1522 = vunpack.c.l.b16 %v260
    %v1523 = vunpack.c.h.b16 %v260
    %v1524 = vunpack.c.l.b16 %v261
    %v1525 = vunpack.c.h.b16 %v261
    %v1526 = vunpack.c.l.b16 %v262
    %v1527 = vunpack.c.h.b16 %v262
    %v1528 = vunpack.c.l.b16 %v263
    %v1529 = vunpack.c.h.b16 %v263
    %v1530 = vunpack.c.l.b16 %v264
    %v1531 = vunpack.c.h.b16 %v264
    %v1532 = vunpack.c.l.b16 %v265
    %v1533 = vunpack.c.h.b16 %v265
    %v1534 = vunpack.c.l.b16 %v266
    %v1535 = vunpack.c.h.b16 %v266
    %v1536 = vunpack.c.l.b16 %v267
    %v1537 = vunpack.c.h.b16 %v267
    %v1538 = vunpack.c.l.b16 %v268
    %v1539 = vunpack.c.h.b16 %v268
    %v1540 = vunpack.c.l.b16 %v269
    %v1541 = vunpack.c.h.b16 %v269
    %v1542 = vunpack.c.l.b16 %v270
    %v1543 = vunpack.c.h.b16 %v270
    %v1544 = vunpack.c.l.b16 %v271
    %v1545 = vunpack.c.h.b16 %v271
    %v1546 = vunpack.c.l.b16 %v272
    %v1547 = vunpack.c.h.b16 %v272
    %v1548 = vunpack.c.l.b16 %v273
    %v1549 = vunpack.c.h.b16 %v273
    %v1550 = vunpack.c.l.b16 %v274
    %v1551 = vunpack.c.h.b16 %v274
    %v1552 = vunpack.c.l.b16 %v275
    %v1553 = vunpack.c.h.b16 %v275
    %v1554 = vunpack.c.l.b16 %v276
    %v1555 = vunpack.c.h.b16 %v276
    %v1556 = vunpack.c.l.b16 %v277
    %v1557 = vunpack.c.h.b16 %v277
    %v1558 = vunpack.c.l.b16 %v278
    %v1559 = vunpack.c.h.b16 %v278
    %v1560 = vunpack.c.l.b16 %v279
    %v1561 = vunpack.c.h.b16 %v279
    %v1562 = vunpack.c.l.b16 %v280
    %v1563 = vunpack.c.h.b16 %v280
    %v1564 = vunpack.c.l.b16 %v281
    %v1565 = vunpack.c.h.b16 %v281
    %v1566 = vunpack.c.l.b16 %v282
    %v1567 = vunpack.c.h.b16 %v282
    %v1568 = vunpack.c.l.b16 %v283
    %v1569 = vunpack.c.h.b16 %v283
    %v1570 = vunpack.c.l.b16 %v284
    %v1571 = vunpack.c.h.b16 %v284
    %v1572 = vunpack.c.l.b16 %v285
    %v1573 = vunpack.c.h.b16 %v285
    %v1574 = vunpack.c.l.b16 %v286
    %v1575 = vunpack.c.h.b16 %v286
    %v1576 = vunpack.c.l.b16 %v287
    %v1577 = vunpack.c.h.b16 %v287
    %v1578 = vunpack.c.l.b16 %v288
    %v1579 = vunpack.c.h.b16 %v288
    %v1580 = vunpack.c.l.b16 %v289
    %v1581 = vunpack.c.h.b16 %v289
    %v1582 = vunpack.c.l.b16 %v290
    %v1583 = vunpack.c.h.b16 %v290
    %v1584 = vunpack.c.l.b16 %v291
    %v1585 = vunpack.c.h.b16 %v291
    %v1586 = vunpack.c.l.b16 %v292
    %v1587 = vunpack.c.h.b16 %v292
    %v1588 = vunpack.c.l.b16 %v293
    %v1589 = vunpack.c.h.b16 %v293
    %v1590 = vunpack.c.l.b16 %v294
    %v1591 = vunpack.c.h.b16 %v294
    %v1592 = vunpack.c.l.b16 %v295
    %v1593 = vunpack.c.h.b16 %v295
    %v1594 = vunpack.c.l.b16 %v296
    %v1595 = vunpack.c.h.b16 %v296
    %v1596 = vunpack.c.l.b16 %v297
    %v1597 = vunpack.c.h.b16 %v297
    %v1598 = vunpack.c.l.b16 %v298
    %v1599 = vunpack.c.h.b16 %v298
    %v1600 = vunpack.c.l.b16 %v299
    %v1601 = vunpack.c.h.b16 %v299
    %v1602 = vunpack.c.l.b16 %v300
    %v1603 = vunpack.c.h.b16 %v300
    %v1604 = vunpack.c.l.b16 %v301
    %v1605 = vunpack.c.h.b16 %v301
    %v1606 = vunpack.c.l.b16 %v302
    %v1607 = vunpack.c.h.b16 %v302
    %v1608 = vunpack.c.l.b16 %v303
    %v1609 = vunpack.c.h.b16 %v303
    %v1610 = vunpack.c.l.b16 %v304
    %v1611 = vunpack.c.h.b16 %v304
    %v1612 = vunpack.c.l.b16 %v305
    %v1613 = vunpack.c.h.b16 %v305
    %v1614 = vunpack.c.l.b16 %v306
    %v1615 = vunpack.c.h.b16 %v306
    %v1616 = vunpack.c.l.b16 %v307
    %v1617 = vunpack.c.h.b16 %v307
    %v1618 = vunpack.c.l.b16 %v308
    %v1619 = vunpack.c.h.b16 %v308
    %v1620 = vunpack.c.l.b16 %v309
    %v1621 = vunpack.c.h.b16 %v309
    %v1622 = vunpack.c.l.b16 %v310
    %v1623 = vunpack.c.h.b16 %v310
    %v1624 = vunpack.c.l.b16 %v311
    %v1625 = vunpack.c.h.b16 %v311
    %v1626 = vunpack.c.l.b16 %v312
    %v1627 = vunpack.c.h.b16 %v312
    %v1628 = vunpack.c.l.b16 %v313
    %v1629 = vunpack.c.h.b16 %v313
    %v1630 = vunpack.c.l.b16 %v314
    %v1631 = vunpack.c.h.b16 %v314
    %v1632 = vunpack.c.l.b16 %v315
    %v1633 = vunpack.c.h.b16 %v315
    %v1634 = vunpack.c.l.b16 %v316
    %v1635 = vunpack.c.h.b16 %v316
    %v1636 = vunpack.c.l.b16 %v317
    %v1637 = vunpack.c.h.b16 %v317
    %v1638 = vunpack.c.l.b16 %v318
    %v1639 = vunpack.c.h.b16 %v318
    %v1640 = vunpack.c.l.b16 %v319
    %v1641 = vunpack.c.h.b16 %v319
    %v1642 = vunpack.c.l.b16 %v320
    %v1643 = vunpack.c.h.b16 %v320
    %v1644 = vunpack.c.l.b16 %v321
    %v1645 = vunpack.c.h.b16 %v321
    %v1646 = vunpack.c.l.b16 %v322
    %v1647 = vunpack.c.h.b16 %v322
    %v1648 = vunpack.c.l.b16 %v323
    %v1649 = vunpack.c.h.b16 %v323
    %v1650 = vunpack.c.l.b16 %v324
    %v1651 = vunpack.c.h.b16 %v324
    %v1652 = vunpack.c.l.b16 %v325
    %v1653 = vunpack.c.h.b16 %v325
    %v1654 = vunpack.c.l.b16 %v326
    %v1655 = vunpack.c.h.b16 %v326
    %v1656 = vunpack.c.l.b16 %v327
    %v1657 = vunpack.c.h.b16 %v327
    %v1658 = vunpack.c.l.b16 %v328
    %v1659 = vunpack.c.h.b16 %v328
    %v1660 = vunpack.c.l.b16 %v329
    %v1661 = vunpack.c.h.b16 %v329
    %v1662 = vunpack.c.l.b16 %v330
    %v1663 = vunpack.c.h.b16 %v330
    %v1664 = vunpack.c.l.b16 %v331
    %v1665 = vunpack.c.h.b16 %v331
    %v1666 = vunpack.c.l.b16 %v332
    %v1667 = vunpack.c.h.b16 %v332
    %v1668 = vunpack.c.l.b16 %v333
    %v1669 = vunpack.c.h.b16 %v333
    %v1670 = vunpack.c.l.b16 %v334
    %v1671 = vunpack.c.h.b16 %v334
    %v1672 = vunpack.c.l.b16 %v335
    %v1673 = vunpack.c.h.b16 %v335
    %v1674 = vunpack.c.l.b16 %v336
    %v1675 = vunpack.c.h.b16 %v336
    %v1676 = vunpack.c.l.b16 %v337
    %v1677 = vunpack.c.h.b16 %v337
    %v1678 = vunpack.c.l.b16 %v338
    %v1679 = vunpack.c.h.b16 %v338
    %v1680 = vunpack.c.l.b16 %v339
    %v1681 = vunpack.c.h.b16 %v339
    %v1682 = vunpack.c.l.b16 %v340
    %v1683 = vunpack.c.h.b16 %v340
    %v1684 = vunpack.c.l.b16 %v341
    %v1685 = vunpack.c.h.b16 %v341
    %v1686 = vunpack.c.l.b16 %v342
    %v1687 = vunpack.c.h.b16 %v342
    %v1688 = vunpack.c.l.b16 %v343
    %v1689 = vunpack.c.h.b16 %v343
    %v1690 = vunpack.c.l.b16 %v344
    %v1691 = vunpack.c.h.b16 %v344
    %v1692 = vunpack.c.l.b16 %v345
    %v1693 = vunpack.c.h.b16 %v345
    %v1694 = vunpack.c.l.b16 %v346
    %v1695 = vunpack.c.h.b16 %v346
    %v1696 = vunpack.c.l.b16 %v347
    %v1697 = vunpack.c.h.b16 %v347
    %v1698 = vunpack.c.l.b16 %v348
    %v1699 = vunpack.c.h.b16 %v348
    %v1700 = vunpack.c.l.b16 %v349
    %v1701 = vunpack.c.h.b16 %v349
    %v1702 = vunpack.c.l.b16 %v350
    %v1703 = vunpack.c.h.b16 %v350
    %v1704 = vunpack.c.l.b16 %v351
    %v1705 = vunpack.c.h.b16 %v351
    %v1706 = vunpack.c.l.b16 %v352
    %v1707 = vunpack.c.h.b16 %v352
    %v1708 = vunpack.c.l.b16 %v353
    %v1709 = vunpack.c.h.b16 %v353
    %v1710 = vunpack.c.l.b16 %v354
    %v1711 = vunpack.c.h.b16 %v354
    %v1712 = vunpack.c.l.b16 %v355
    %v1713 = vunpack.c.h.b16 %v355
    %v1714 = vunpack.c.l.b16 %v356
    %v1715 = vunpack.c.h.b16 %v356
    %v1716 = vunpack.c.l.b16 %v357
    %v1717 = vunpack.c.h.b16 %v357
    %v1718 = vunpack.c.l.b16 %v358
    %v1719 = vunpack.c.h.b16 %v358
    %v1720 = vunpack.c.l.b16 %v359
    %v1721 = vunpack.c.h.b16 %v359
    %v1722 = vunpack.c.l.b16 %v360
    %v1723 = vunpack.c.h.b16 %v360
    %v1724 = vunpack.c.l.b16 %v361
    %v1725 = vunpack.c.h.b16 %v361
    %v1726 = vunpack.c.l.b16 %v362
    %v1727 = vunpack.c.h.b16 %v362
    %v1728 = vunpack.c.l.b16 %v363
    %v1729 = vunpack.c.h.b16 %v363
    %v1730 = vunpack.c.l.b16 %v364
    %v1731 = vunpack.c.h.b16 %v364
    %v1732 = vunpack.c.l.b16 %v365
    %v1733 = vunpack.c.h.b16 %v365
    %v1734 = vunpack.c.l.b16 %v366
    %v1735 = vunpack.c.h.b16 %v366
    %v1736 = vunpack.c.l.b16 %v367
    %v1737 = vunpack.c.h.b16 %v367
    %v1738 = vunpack.c.l.b16 %v368
    %v1739 = vunpack.c.h.b16 %v368
    %v1740 = vunpack.c.l.b16 %v369
    %v1741 = vunpack.c.h.b16 %v369
    %v1742 = vunpack.c.l.b16 %v370
    %v1743 = vunpack.c.h.b16 %v370
    %v1744 = vunpack.c.l.b16 %v371
    %v1745 = vunpack.c.h.b16 %v371
    %v1746 = vunpack.c.l.b16 %v372
    %v1747 = vunpack.c.h.b16 %v372
    %v1748 = vunpack.c.l.b16 %v373
    %v1749 = vunpack.c.h.b16 %v373
    %v1750 = vunpack.c.l.b16 %v374
    %v1751 = vunpack.c.h.b16 %v374
    %v1752 = vunpack.c.l.b16 %v375
    %v1753 = vunpack.c.h.b16 %v375
    %v1754 = vunpack.c.l.b16 %v376
    %v1755 = vunpack.c.h.b16 %v376
    %v1756 = vunpack.c.l.b16 %v377
    %v1757 = vunpack.c.h.b16 %v377
    %v1758 = vunpack.c.l.b16 %v378
    %v1759 = vunpack.c.h.b16 %v378
    %v1760 = vunpack.c.l.b16 %v379
    %v1761 = vunpack.c.h.b16 %v379
    %v1762 = vunpack.c.l.b16 %v380
    %v1763 = vunpack.c.h.b16 %v380
    %v1764 = vunpack.c.l.b16 %v381
    %v1765 = vunpack.c.h.b16 %v381
    %v1766 = vunpack.c.l.b16 %v382
    %v1767 = vunpack.c.h.b16 %v382
    %v1768 = vunpack.c.l.b16 %v383
    %v1769 = vunpack.c.h.b16 %v383
    %v1770 = vunpack.c.l.b16 %v384
    %v1771 = vunpack.c.h.b16 %v384
    %v1772 = vunpack.c.l.b16 %v385
    %v1773 = vunpack.c.h.b16 %v385
    %v1774 = vunpack.c.l.b16 %v386
    %v1775 = vunpack.c.h.b16 %v386
    %v1776 = vunpack.c.l.b16 %v387
    %v1777 = vunpack.c.h.b16 %v387
    %v1778 = vunpack.c.l.b16 %v388
    %v1779 = vunpack.c.h.b16 %v388
    %v1780 = vunpack.c.l.b16 %v389
    %v1781 = vunpack.c.h.b16 %v389
    %v1782 = vunpack.c.l.b16 %v390
    %v1783 = vunpack.c.h.b16 %v390
    %v1784 = vunpack.c.l.b16 %v391
    %v1785 = vunpack.c.h.b16 %v391
    %v1786 = vunpack.c.l.b16 %v392
    %v1787 = vunpack.c.h.b16 %v392
    %v1788 = vunpack.c.l.b16 %v393
    %v1789 = vunpack.c.h.b16 %v393
    %v1790 = vunpack.c.l.b16 %v394
    %v1791 = vunpack.c.h.b16 %v394
    %v1792 = vunpack.c.l.b16 %v395
    %v1793 = vunpack.c.h.b16 %v395
    %v1794 = vunpack.c.l.b16 %v396
    %v1795 = vunpack.c.h.b16 %v396
    %v1796 = vunpack.c.l.b16 %v397
    %v1797 = vunpack.c.h.b16 %v397
    %v1798 = vunpack.c.l.b16 %v398
    %v1799 = vunpack.c.h.b16 %v398
    %v1800 = vunpack.c.l.b16 %v399
    %v1801 = vunpack.c.h.b16 %v399
    %v1802 = vunpack.c.l.b16 %v400
    %v1803 = vunpack.c.h.b16 %v400
    %v1804 = vunpack.c.l.b16 %v401
    %v1805 = vunpack.c.h.b16 %v401
    %v1806 = vunpack.c.l.b16 %v402
    %v1807 = vunpack.c.h.b16 %v402
    %v1808 = vunpack.c.l.b16 %v403
    %v1809 = vunpack.c.h.b16 %v403
    %v1810 = vunpack.c.l.b16 %v404
    %v1811 = vunpack.c.h.b16 %v404
    %v1812 = vunpack.c.l.b16 %v405
    %v1813 = vunpack.c.h.b16 %v405
    %v1814 = vunpack.c.l.b16 %v406
    %v1815 = vunpack.c.h.b16 %v406
    %v1816 = vunpack.c.l.b16 %v407
    %v1817 = vunpack.c.h.b16 %v407
    %v1818 = vunpack.c.l.b16 %v408
    %v1819 = vunpack.c.h.b16 %v408
    %v1820 = vunpack.c.l.b16 %v409
    %v1821 = vunpack.c.h.b16 %v409
    %v1822 = vunpack.c.l.b16 %v410
    %v1823 = vunpack.c.h.b16 %v410
    %v1824 = vunpack.c.l.b16 %v411
    %v1825 = vunpack.c.h.b16 %v411
    %v1826 = vunpack.c.l.b16 %v412
    %v1827 = vunpack.c.h.b16 %v412
    %v1828 = vunpack.c.l.b16 %v413
    %v1829 = vunpack.c.h.b16 %v413
    %v1830 = vunpack.c.l.b16 %v414
    %v1831 = vunpack.c.h.b16 %v414
    %v1832 = vunpack.c.l.b16 %v415
    %v1833 = vunpack.c.h.b16 %v415
    %v1834 = vunpack.c.l.b16 %v416
    %v1835 = vunpack.c.h.b16 %v416
    %v1836 = vunpack.c.l.b16 %v417
    %v1837 = vunpack.c.h.b16 %v417
    %v1838 = vunpack.c.l.b16 %v418
    %v1839 = vunpack.c.h.b16 %v418
    %v1840 = vunpack.c.l.b16 %v419
    %v1841 = vunpack.c.h.b16 %v419
    %v1842 = vunpack.c.l.b16 %v420
    %v1843 = vunpack.c.h.b16 %v420
    %v1844 = vunpack.c.l.b16 %v421
    %v1845 = vunpack.c.h.b16 %v421
    %v1846 = vunpack.c.l.b16 %v422
    %v1847 = vunpack.c.h.b16 %v422
    %v1848 = vunpack.c.l.b16 %v423
    %v1849 = vunpack.c.h.b16 %v423
    %v1850 = vunpack.c.l.b16 %v424
    %v1851 = vunpack.c.h.b16 %v424
    %v1852 = vunpack.c.l.b16 %v425
    %v1853 = vunpack.c.h.b16 %v425
    %v1854 = vunpack.c.l.b16 %v426
    %v1855 = vunpack.c.h.b16 %v426
    %v1856 = vunpack.c.l.b16 %v427
    %v1857 = vunpack.c.h.b16 %v427
    %v1858 = vunpack.c.l.b16 %v428
    %v1859 = vunpack.c.h.b16 %v428
    %v1860 = vunpack.c.l.b16 %v429
    %v1861 = vunpack.c.h.b16 %v429
    %v1862 = vunpack.c.l.b16 %v430
    %v1863 = vunpack.c.h.b16 %v430
    %v1864 = vunpack.c.l.b16 %v431
    %v1865 = vunpack.c.h.b16 %v431
    %v1866 = vunpack.c.l.b16 %v432
    %v1867 = vunpack.c.h.b16 %v432
    %v1868 = vunpack.c.l.b16 %v433
    %v1869 = vunpack.c.h.b16 %v433
    %v1870 = vunpack.c.l.b16 %v434
    %v1871 = vunpack.c.h.b16 %v434
    %v1872 = vunpack.c.l.b16 %v435
    %v1873 = vunpack.c.h.b16 %v435
    %v1874 = vunpack.c.l.b16 %v436
    %v1875 = vunpack.c.h.b16 %v436
    %v1876 = vunpack.c.l.b16 %v437
    %v1877 = vunpack.c.h.b16 %v437
    %v1878 = vunpack.c.l.b16 %v438
    %v1879 = vunpack.c.h.b16 %v438
    %v1880 = vunpack.c.l.b16 %v439
    %v1881 = vunpack.c.h.b16 %v439
    %v1882 = vunpack.c.l.b16 %v440
    %v1883 = vunpack.c.h.b16 %v440
    %v1884 = vunpack.c.l.b16 %v441
    %v1885 = vunpack.c.h.b16 %v441
    %v1886 = vunpack.c.l.b16 %v442
    %v1887 = vunpack.c.h.b16 %v442
    %v1888 = vunpack.c.l.b16 %v443
    %v1889 = vunpack.c.h.b16 %v443
    %v1890 = vunpack.c.l.b16 %v444
    %v1891 = vunpack.c.h.b16 %v444
    %v1892 = vunpack.c.l.b16 %v445
    %v1893 = vunpack.c.h.b16 %v445
    %v1894 = vunpack.c.l.b16 %v446
    %v1895 = vunpack.c.h.b16 %v446
    %v1896 = vunpack.c.l.b16 %v447
    %v1897 = vunpack.c.h.b16 %v447
    %v1898 = vunpack.c.l.b16 %v448
    %v1899 = vunpack.c.h.b16 %v448
    %v1900 = vunpack.c.l.b16 %v449
    %v1901 = vunpack.c.h.b16 %v449
    %v1902 = vunpack.c.l.b16 %v450
    %v1903 = vunpack.c.h.b16 %v450
    %v1904 = vunpack.c.l.b16 %v451
    %v1905 = vunpack.c.h.b16 %v451
    %v1906 = vunpack.c.l.b16 %v452
    %v1907 = vunpack.c.h.b16 %v452
    %v1908 = vunpack.c.l.b16 %v453
    %v1909 = vunpack.c.h.b16 %v453
    %v1910 = vunpack.c.l.b16 %v454
    %v1911 = vunpack.c.h.b16 %v454
    %v1912 = vunpack.c.l.b16 %v455
    %v1913 = vunpack.c.h.b16 %v455
    %v1914 = vunpack.c.l.b16 %v456
    %v1915 = vunpack.c.h.b16 %v456
    %v1916 = vunpack.c.l.b16 %v457
    %v1917 = vunpack.c.h.b16 %v457
    %v1918 = vunpack.c.l.b16 %v458
    %v1919 = vunpack.c.h.b16 %v458
    %v1920 = vunpack.c.l.b16 %v459
    %v1921 = vunpack.c.h.b16 %v459
    %v1922 = vunpack.c.l.b16 %v460
    %v1923 = vunpack.c.h.b16 %v460
    %v1924 = vunpack.c.l.b16 %v461
    %v1925 = vunpack.c.h.b16 %v461
    %v1926 = vunpack.c.l.b16 %v462
    %v1927 = vunpack.c.h.b16 %v462
    %v1928 = vunpack.c.l.b16 %v463
    %v1929 = vunpack.c.h.b16 %v463
    %v1930 = vunpack.c.l.b16 %v464
    %v1931 = vunpack.c.h.b16 %v464
    %v1932 = vunpack.c.l.b16 %v465
    %v1933 = vunpack.c.h.b16 %v465
    %v1934 = vunpack.c.l.b16 %v466
    %v1935 = vunpack.c.h.b16 %v466
    %v1936 = vunpack.c.l.b16 %v467
    %v1937 = vunpack.c.h.b16 %v467
    %v1938 = vunpack.c.l.b16 %v468
    %v1939 = vunpack.c.h.b16 %v468
    %v1940 = vunpack.c.l.b16 %v469
    %v1941 = vunpack.c.h.b16 %v469
    %v1942 = vunpack.c.l.b16 %v470
    %v1943 = vunpack.c.h.b16 %v470
    %v1944 = vunpack.c.l.b16 %v471
    %v1945 = vunpack.c.h.b16 %v471
    %v1946 = vunpack.c.l.b16 %v472
    %v1947 = vunpack.c.h.b16 %v472
    %v1948 = vunpack.c.l.b16 %v473
    %v1949 = vunpack.c.h.b16 %v473
    %v1950 = vunpack.c.l.b16 %v474
    %v1951 = vunpack.c.h.b16 %v474
    %v1952 = vunpack.c.l.b16 %v475
    %v1953 = vunpack.c.h.b16 %v475
    %v1954 = vunpack.c.l.b16 %v476
    %v1955 = vunpack.c.h.b16 %v476
    %v1956 = vunpack.c.l.b16 %v477
    %v1957 = vunpack.c.h.b16 %v477
    %v1958 = vunpack.c.l.b16 %v478
    %v1959 = vunpack.c.h.b16 %v478
    %v1960 = vunpack.c.l.b16 %v479
    %v1961 = vunpack.c.h.b16 %v479
    %v1962 = vunpack.c.l.b16 %v480
    %v1963 = vunpack.c.h.b16 %v480
    %v1964 = vunpack.c.l.b16 %v481
    %v1965 = vunpack.c.h.b16 %v481
    %v1966 = vunpack.c.l.b16 %v482
    %v1967 = vunpack.c.h.b16 %v482
    %v1968 = vunpack.c.l.b16 %v483
    %v1969 = vunpack.c.h.b16 %v483
    %v1970 = vunpack.c.l.b16 %v484
    %v1971 = vunpack.c.h.b16 %v484
    %v1972 = vunpack.c.l.b16 %v485
    %v1973 = vunpack.c.h.b16 %v485
    %v1974 = vunpack.c.l.b16 %v486
    %v1975 = vunpack.c.h.b16 %v486
    %v1976 = vunpack.c.l.b16 %v487
    %v1977 = vunpack.c.h.b16 %v487
    %v1978 = vunpack.c.l.b16 %v488
    %v1979 = vunpack.c.h.b16 %v488
    %v1980 = vunpack.c.l.b16 %v489
    %v1981 = vunpack.c.h.b16 %v489
    %v1982 = vunpack.c.l.b16 %v490
    %v1983 = vunpack.c.h.b16 %v490
    %v1984 = vunpack.c.l.b16 %v491
    %v1985 = vunpack.c.h.b16 %v491
    %v1986 = vunpack.c.l.b16 %v492
    %v1987 = vunpack.c.h.b16 %v492
    %v1988 = vunpack.c.l.b16 %v493
    %v1989 = vunpack.c.h.b16 %v493
    %v1990 = vunpack.c.l.b16 %v494
    %v1991 = vunpack.c.h.b16 %v494
    %v1992 = vunpack.c.l.b16 %v495
    %v1993 = vunpack.c.h.b16 %v495
    %v1994 = vunpack.c.l.b16 %v496
    %v1995 = vunpack.c.h.b16 %v496
    %v1996 = vunpack.c.l.b16 %v497
    %v1997 = vunpack.c.h.b16 %v497
    %v1998 = vunpack.c.l.b16 %v498
    %v1999 = vunpack.c.h.b16 %v498
    %v2000 = vunpack.c.l.b16 %v499
    %v2001 = vunpack.c.h.b16 %v499
    %v2002 = vunpack.c.l.b16 %v500
    %v2003 = vunpack.c.h.b16 %v500
    %v2004 = vunpack.c.l.b16 %v501
    %v2005 = vunpack.c.h.b16 %v501
    %v2006 = vunpack.c.l.b16 %v502
    %v2007 = vunpack.c.h.b16 %v502
    %v2008 = vunpack.c.l.b16 %v503
    %v2009 = vunpack.c.h.b16 %v503
    %v2010 = vunpack.c.l.b16 %v504
    %v2011 = vunpack.c.h.b16 %v504
    %v2012 = vunpack.c.l.b16 %v505
    %v2013 = vunpack.c.h.b16 %v505
    %v2014 = vunpack.c.l.b16 %v506
    %v2015 = vunpack.c.h.b16 %v506
    %v2016 = vunpack.c.l.b16 %v507
    %v2017 = vunpack.c.h.b16 %v507
    %v2018 = vunpack.c.l.b16 %v508
    %v2019 = vunpack.c.h.b16 %v508
    %v2020 = vunpack.c.l.b16 %v509
    %v2021 = vunpack.c.h.b16 %v509
    %v2022 = vunpack.c.l.b16 %v510
    %v2023 = vunpack.c.h.b16 %v510
    %v2024 = vunpack.c.l.b16 %v511
    %v2025 = vunpack.c.h.b16 %v511
    %v2026 = vunpack.c.l.b16 %v512
    %v2027 = vunpack.c.h.b16 %v512
    %v2028 = vunpack.c.l.b16 %v513
    %v2029 = vunpack.c.h.b16 %v513
    %v2030 = vunpack.c.l.b16 %v514
    %v2031 = vunpack.c.h.b16 %v514
    %v2032 = vunpack.c.l.b16 %v515
    %v2033 = vunpack.c.h.b16 %v515
    %v2034 = vunpack.c.l.b16 %v516
    %v2035 = vunpack.c.h.b16 %v516
    %v2036 = vunpack.c.l.b16 %v517
    %v2037 = vunpack.c.h.b16 %v517
    %v2038 = vunpack.c.l.b16 %v518
    %v2039 = vunpack.c.h.b16 %v518
    %v2040 = vunpack.c.l.b16 %v519
    %v2041 = vunpack.c.h.b16 %v519
    %v2042 = vunpack.c.l.b16 %v520
    %v2043 = vunpack.c.h.b16 %v520
    %v2044 = vunpack.c.l.b16 %v521
    %v2045 = vunpack.c.h.b16 %v521
    %v2046 = vunpack.c.l.b16 %v522
    %v2047 = vunpack.c.h.b16 %v522
    %v2048 = vunpack.c.l.b16 %v523
    %v2049 = vunpack.c.h.b16 %v523
    %v2050 = vunpack.c.l.b16 %v524
    %v2051 = vunpack.c.h.b16 %v524
    %v2052 = vunpack.c.l.b16 %v525
    %v2053 = vunpack.c.h.b16 %v525
    %v2054 = vunpack.c.l.b16 %v526
    %v2055 = vunpack.c.h.b16 %v526
    %v2056 = vunpack.c.l.b16 %v527
    %v2057 = vunpack.c.h.b16 %v527
    %v2058 = vunpack.c.l.b16 %v528
    %v2059 = vunpack.c.h.b16 %v528
    %v2060 = vunpack.c.l.b16 %v529
    %v2061 = vunpack.c.h.b16 %v529
    %v2062 = vunpack.c.l.b16 %v530
    %v2063 = vunpack.c.h.b16 %v530
    %v2064 = vunpack.c.l.b16 %v531
    %v2065 = vunpack.c.h.b16 %v531
    %v2066 = vunpack.c.l.b16 %v532
    %v2067 = vunpack.c.h.b16 %v532
    %v2068 = vunpack.c.l.b16 %v533
    %v2069 = vunpack.c.h.b16 %v533
    %v2070 = vunpack.c.l.b16 %v534
    %v2071 = vunpack.c.h.b16 %v534
    %v2072 = vunpack.c.l.b16 %v535
    %v2073 = vunpack.c.h.b16 %v535
    %v2074 = vunpack.c.l.b16 %v536
    %v2075 = vunpack.c.h.b16 %v536
    %v2076 = vunpack.c.l.b16 %v537
    %v2077 = vunpack.c.h.b16 %v537
    %v2078 = vunpack.c.l.b16 %v538
    %v2079 = vunpack.c.h.b16 %v538
    %v2080 = vunpack.c.l.b16 %v539
    %v2081 = vunpack.c.h.b16 %v539
    %v2082 = vunpack.c.l.b16 %v540
    %v2083 = vunpack.c.h.b16 %v540
    %v2084 = vunpack.c.l.b16 %v541
    %v2085 = vunpack.c.h.b16 %v541
    %v2086 = vunpack.c.l.b16 %v542
    %v2087 = vunpack.c.h.b16 %v542
    %v2088 = vunpack.c.l.b16 %v543
    %v2089 = vunpack.c.h.b16 %v543
    %v2090 = vunpack.c.l.b16 %v544
    %v2091 = vunpack.c.h.b16 %v544
    %v2092 = vunpack.c.l.b16 %v545
    %v2093 = vunpack.c.h.b16 %v545
    %v2094 = vunpack.c.l.b16 %v546
    %v2095 = vunpack.c.h.b16 %v546
    %v2096 = vunpack.c.l.b16 %v547
    %v2097 = vunpack.c.h.b16 %v547
    %v2098 = vunpack.c.l.b16 %v548
    %v2099 = vunpack.c.h.b16 %v548
    %v2100 = vunpack.c.l.b16 %v549
    %v2101 = vunpack.c.h.b16 %v549
    %v2102 = vunpack.c.l.b16 %v550
    %v2103 = vunpack.c.h.b16 %v550
    %v2104 = vunpack.c.l.b16 %v551
    %v2105 = vunpack.c.h.b16 %v551
    %v2106 = vunpack.c.l.b16 %v552
    %v2107 = vunpack.c.h.b16 %v552
    %v2108 = vunpack.c.l.b16 %v553
    %v2109 = vunpack.c.h.b16 %v553
    %v2110 = vunpack.c.l.b16 %v554
    %v2111 = vunpack.c.h.b16 %v554
    %v2112 = vunpack.c.l.b16 %v555
    %v2113 = vunpack.c.h.b16 %v555
    %v2114 = vunpack.c.l.b16 %v556
    %v2115 = vunpack.c.h.b16 %v556
    %v2116 = vunpack.c.l.b16 %v557
    %v2117 = vunpack.c.h.b16 %v557
    %v2118 = vunpack.c.l.b16 %v558
    %v2119 = vunpack.c.h.b16 %v558
    %v2120 = vunpack.c.l.b16 %v559
    %v2121 = vunpack.c.h.b16 %v559
    %v2122 = vunpack.c.l.b16 %v560
    %v2123 = vunpack.c.h.b16 %v560
    %v2124 = vunpack.c.l.b16 %v561
    %v2125 = vunpack.c.h.b16 %v561
    %v2126 = vunpack.c.l.b16 %v562
    %v2127 = vunpack.c.h.b16 %v562
    %v2128 = vunpack.c.l.b16 %v563
    %v2129 = vunpack.c.h.b16 %v563
    %v2130 = vunpack.c.l.b16 %v564
    %v2131 = vunpack.c.h.b16 %v564
    %v2132 = vunpack.c.l.b16 %v565
    %v2133 = vunpack.c.h.b16 %v565
    %v2134 = vunpack.c.l.b16 %v566
    %v2135 = vunpack.c.h.b16 %v566
    %v2136 = vunpack.c.l.b16 %v567
    %v2137 = vunpack.c.h.b16 %v567
    %v2138 = vunpack.c.l.b16 %v568
    %v2139 = vunpack.c.h.b16 %v568
    %v2140 = vunpack.c.l.b16 %v569
    %v2141 = vunpack.c.h.b16 %v569
    %v2142 = vunpack.c.l.b16 %v570
    %v2143 = vunpack.c.h.b16 %v570
    %v2144 = vunpack.c.l.b16 %v571
    %v2145 = vunpack.c.h.b16 %v571
    %v2146 = vunpack.c.l.b16 %v572
    %v2147 = vunpack.c.h.b16 %v572
    %v2148 = vunpack.c.l.b16 %v573
    %v2149 = vunpack.c.h.b16 %v573
    %v2150 = vunpack.c.l.b16 %v574
    %v2151 = vunpack.c.h.b16 %v574
    %v2152 = vunpack.c.l.b16 %v575
    %v2153 = vunpack.c.h.b16 %v575
    %v2154 = vpack.c.b16 %v1138, %v1130
    %v2155 = vpack.c.b16 %v1139, %v1131
    %v2156 = vpack.c.b16 %v1140, %v1132
    %v2157 = vpack.c.b16 %v1141, %v1133
    %v2158 = vpack.c.b16 %v1142, %v1134
    %v2159 = vpack.c.b16 %v1143, %v1135
    %v2160 = vpack.c.b16 %v1144, %v1136
    %v2161 = vpack.c.b16 %v1145, %v1137
    %v2162 = vpack.c.b16 %v1154, %v1146
    %v2163 = vpack.c.b16 %v1155, %v1147
    %v2164 = vpack.c.b16 %v1156, %v1148
    %v2165 = vpack.c.b16 %v1157, %v1149
    %v2166 = vpack.c.b16 %v1158, %v1150
    %v2167 = vpack.c.b16 %v1159, %v1151
    %v2168 = vpack.c.b16 %v1160, %v1152
    %v2169 = vpack.c.b16 %v1161, %v1153
    %v2170 = vpack.c.b16 %v1170, %v1162
    %v2171 = vpack.c.b16 %v1171, %v1163
    %v2172 = vpack.c.b16 %v1172, %v1164
    %v2173 = vpack.c.b16 %v1173, %v1165
    %v2174 = vpack.c.b16 %v1174, %v1166
    %v2175 = vpack.c.b16 %v1175, %v1167
    %v2176 = vpack.c.b16 %v1176, %v1168
    %v2177 = vpack.c.b16 %v1177, %v1169
    %v2178 = vpack.c.b16 %v1186, %v1178
    %v2179 = vpack.c.b16 %v1187, %v1179
    %v2180 = vpack.c.b16 %v1188, %v1180
    %v2181 = vpack.c.b16 %v1189, %v1181
    %v2182 = vpack.c.b16 %v1190, %v1182
    %v2183 = vpack.c.b16 %v1191, %v1183
    %v2184 = vpack.c.b16 %v1192, %v1184
    %v2185 = vpack.c.b16 %v1193, %v1185
    %v2186 = vpack.c.b16 %v1202, %v1194
    %v2187 = vpack.c.b16 %v1203, %v1195
    %v2188 = vpack.c.b16 %v1204, %v1196
    %v2189 = vpack.c.b16 %v1205, %v1197
    %v2190 = vpack.c.b16 %v1206, %v1198
    %v2191 = vpack.c.b16 %v1207, %v1199
    %v2192 = vpack.c.b16 %v1208, %v1200
    %v2193 = vpack.c.b16 %v1209, %v1201
    %v2194 = vpack.c.b16 %v1218, %v1210
    %v2195 = vpack.c.b16 %v1219, %v1211
    %v2196 = vpack.c.b16 %v1220, %v1212
    %v2197 = vpack.c.b16 %v1221, %v1213
    %v2198 = vpack.c.b16 %v1222, %v1214
    %v2199 = vpack.c.b16 %v1223, %v1215
    %v2200 = vpack.c.b16 %v1224, %v1216
    %v2201 = vpack.c.b16 %v1225, %v1217
    %v2202 = vpack.c.b16 %v1234, %v1226
    %v2203 = vpack.c.b16 %v1235, %v1227
    %v2204 = vpack.c.b16 %v1236, %v1228
    %v2205 = vpack.c.b16 %v1237, %v1229
    %v2206 = vpack.c.b16 %v1238, %v1230
    %v2207 = vpack.c.b16 %v1239, %v1231
    %v2208 = vpack.c.b16 %v1240, %v1232
    %v2209 = vpack.c.b16 %v1241, %v1233
    %v2210 = vpack.c.b16 %v1250, %v1242
    %v2211 = vpack.c.b16 %v1251, %v1243
    %v2212 = vpack.c.b16 %v1252, %v1244
    %v2213 = vpack.c.b16 %v1253, %v1245
    %v2214 = vpack.c.b16 %v1254, %v1246
    %v2215 = vpack.c.b16 %v1255, %v1247
    %v2216 = vpack.c.b16 %v1256, %v1248
    %v2217 = vpack.c.b16 %v1257, %v1249
    %v2218 = vpack.c.b16 %v1266, %v1258
    %v2219 = vpack.c.b16 %v1267, %v1259
    %v2220 = vpack.c.b16 %v1268, %v1260
    %v2221 = vpack.c.b16 %v1269, %v1261
    %v2222 = vpack.c.b16 %v1270, %v1262
    %v2223 = vpack.c.b16 %v1271, %v1263
    %v2224 = vpack.c.b16 %v1272, %v1264
    %v2225 = vpack.c.b16 %v1273, %v1265
    %v2226 = vpack.c.b16 %v1282, %v1274
    %v2227 = vpack.c.b16 %v1283, %v1275
    %v2228 = vpack.c.b16 %v1284, %v1276
    %v2229 = vpack.c.b16 %v1285, %v1277
    %v2230 = vpack.c.b16 %v1286, %v1278
    %v2231 = vpack.c.b16 %v1287, %v1279
    %v2232 = vpack.c.b16 %v1288, %v1280
    %v2233 = vpack.c.b16 %v1289, %v1281
    %v2234 = vpack.c.b16 %v1298, %v1290
    %v2235 = vpack.c.b16 %v1299, %v1291
    %v2236 = vpack.c.b16 %v1300, %v1292
    %v2237 = vpack.c.b16 %v1301, %v1293
    %v2238 = vpack.c.b16 %v1302, %v1294
    %v2239 = vpack.c.b16 %v1303, %v1295
    %v2240 = vpack.c.b16 %v1304, %v1296
    %v2241 = vpack.c.b16 %v1305, %v1297
    %v2242 = vpack.c.b16 %v1314, %v1306
    %v2243 = vpack.c.b16 %v1315, %v1307
    %v2244 = vpack.c.b16 %v1316, %v1308
    %v2245 = vpack.c.b16 %v1317, %v1309
    %v2246 = vpack.c.b16 %v1318, %v1310
    %v2247 = vpack.c.b16 %v1319, %v1311
    %v2248 = vpack.c.b16 %v1320, %v1312
    %v2249 = vpack.c.b16 %v1321, %v1313
    %v2250 = vpack.c.b16 %v1330, %v1322
    %v2251 = vpack.c.b16 %v1331, %v1323
    %v2252 = vpack.c.b16 %v1332, %v1324
    %v2253 = vpack.c.b16 %v1333, %v1325
    %v2254 = vpack.c.b16 %v1334, %v1326
    %v2255 = vpack.c.b16 %v1335, %v1327
    %v2256 = vpack.c.b16 %v1336, %v1328
    %v2257 = vpack.c.b16 %v1337, %v1329
    %v2258 = vpack.c.b16 %v1346, %v1338
    %v2259 = vpack.c.b16 %v1347, %v1339
    %v2260 = vpack.c.b16 %v1348, %v1340
    %v2261 = vpack.c.b16 %v1349, %v1341
    %v2262 = vpack.c.b16 %v1350, %v1342
    %v2263 = vpack.c.b16 %v1351, %v1343
    %v2264 = vpack.c.b16 %v1352, %v1344
    %v2265 = vpack.c.b16 %v1353, %v1345
    %v2266 = vpack.c.b16 %v1362, %v1354
    %v2267 = vpack.c.b16 %v1363, %v1355
    %v2268 = vpack.c.b16 %v1364, %v1356
    %v2269 = vpack.c.b16 %v1365, %v1357
    %v2270 = vpack.c.b16 %v1366, %v1358
    %v2271 = vpack.c.b16 %v1367, %v1359
    %v2272 = vpack.c.b16 %v1368, %v1360
    %v2273 = vpack.c.b16 %v1369, %v1361
    %v2274 = vpack.c.b16 %v1378, %v1370
    %v2275 = vpack.c.b16 %v1379, %v1371
    %v2276 = vpack.c.b16 %v1380, %v1372
    %v2277 = vpack.c.b16 %v1381, %v1373
    %v2278 = vpack.c.b16 %v1382, %v1374
    %v2279 = vpack.c.b16 %v1383, %v1375
    %v2280 = vpack.c.b16 %v1384, %v1376
    %v2281 = vpack.c.b16 %v1385, %v1377
    %v2282 = vpack.c.b16 %v1394, %v1386
    %v2283 = vpack.c.b16 %v1395, %v1387
    %v2284 = vpack.c.b16 %v1396, %v1388
    %v2285 = vpack.c.b16 %v1397, %v1389
    %v2286 = vpack.c.b16 %v1398, %v1390
    %v2287 = vpack.c.b16 %v1399, %v1391
    %v2288 = vpack.c.b16 %v1400, %v1392
    %v2289 = vpack.c.b16 %v1401, %v1393
    %v2290 = vpack.c.b16 %v1410, %v1402
    %v2291 = vpack.c.b16 %v1411, %v1403
    %v2292 = vpack.c.b16 %v1412, %v1404
    %v2293 = vpack.c.b16 %v1413, %v1405
    %v2294 = vpack.c.b16 %v1414, %v1406
    %v2295 = vpack.c.b16 %v1415, %v1407
    %v2296 = vpack.c.b16 %v1416, %v1408
    %v2297 = vpack.c.b16 %v1417, %v1409
    %v2298 = vpack.c.b16 %v1426, %v1418
    %v2299 = vpack.c.b16 %v1427, %v1419
    %v2300 = vpack.c.b16 %v1428, %v1420
    %v2301 = vpack.c.b16 %v1429, %v1421
    %v2302 = vpack.c.b16 %v1430, %v1422
    %v2303 = vpack.c.b16 %v1431, %v1423
    %v2304 = vpack.c.b16 %v1432, %v1424
    %v2305 = vpack.c.b16 %v1433, %v1425
    %v2306 = vpack.c.b16 %v1442, %v1434
    %v2307 = vpack.c.b16 %v1443, %v1435
    %v2308 = vpack.c.b16 %v1444, %v1436
    %v2309 = vpack.c.b16 %v1445, %v1437
    %v2310 = vpack.c.b16 %v1446, %v1438
    %v2311 = vpack.c.b16 %v1447, %v1439
    %v2312 = vpack.c.b16 %v1448, %v1440
    %v2313 = vpack.c.b16 %v1449, %v1441
    %v2314 = vpack.c.b16 %v1458, %v1450
    %v2315 = vpack.c.b16 %v1459, %v1451
    %v2316 = vpack.c.b16 %v1460, %v1452
    %v2317 = vpack.c.b16 %v1461, %v1453
    %v2318 = vpack.c.b16 %v1462, %v1454
    %v2319 = vpack.c.b16 %v1463, %v1455
    %v2320 = vpack.c.b16 %v1464, %v1456
    %v2321 = vpack.c.b16 %v1465, %v1457
    %v2322 = vpack.c.b16 %v1474, %v1466
    %v2323 = vpack.c.b16 %v1475, %v1467
    %v2324 = vpack.c.b16 %v1476, %v1468
    %v2325 = vpack.c.b16 %v1477, %v1469
    %v2326 = vpack.c.b16 %v1478, %v1470
    %v2327 = vpack.c.b16 %v1479, %v1471
    %v2328 = vpack.c.b16 %v1480, %v1472
    %v2329 = vpack.c.b16 %v1481, %v1473
    %v2330 = vpack.c.b16 %v1490, %v1482
    %v2331 = vpack.c.b16 %v1491, %v1483
    %v2332 = vpack.c.b16 %v1492, %v1484
    %v2333 = vpack.c.b16 %v1493, %v1485
    %v2334 = vpack.c.b16 %v1494, %v1486
    %v2335 = vpack.c.b16 %v1495, %v1487
    %v2336 = vpack.c.b16 %v1496, %v1488
    %v2337 = vpack.c.b16 %v1497, %v1489
    %v2338 = vpack.c.b16 %v1506, %v1498
    %v2339 = vpack.c.b16 %v1507, %v1499
    %v2340 = vpack.c.b16 %v1508, %v1500
    %v2341 = vpack.c.b16 %v1509, %v1501
    %v2342 = vpack.c.b16 %v1510, %v1502
    %v2343 = vpack.c.b16 %v1511, %v1503
    %v2344 = vpack.c.b16 %v1512, %v1504
    %v2345 = vpack.c.b16 %v1513, %v1505
    %v2346 = vpack.c.b16 %v1522, %v1514
    %v2347 = vpack.c.b16 %v1523, %v1515
    %v2348 = vpack.c.b16 %v1524, %v1516
    %v2349 = vpack.c.b16 %v1525, %v1517
    %v2350 = vpack.c.b16 %v1526, %v1518
    %v2351 = vpack.c.b16 %v1527, %v1519
    %v2352 = vpack.c.b16 %v1528, %v1520
    %v2353 = vpack.c.b16 %v1529, %v1521
    %v2354 = vpack.c.b16 %v1538, %v1530
    %v2355 = vpack.c.b16 %v1539, %v1531
    %v2356 = vpack.c.b16 %v1540, %v1532
    %v2357 = vpack.c.b16 %v1541, %v1533
    %v2358 = vpack.c.b16 %v1542, %v1534
    %v2359 = vpack.c.b16 %v1543, %v1535
    %v2360 = vpack.c.b16 %v1544, %v1536
    %v2361 = vpack.c.b16 %v1545, %v1537
    %v2362 = vpack.c.b16 %v1554, %v1546
    %v2363 = vpack.c.b16 %v1555, %v1547
    %v2364 = vpack.c.b16 %v1556, %v1548
    %v2365 = vpack.c.b16 %v1557, %v1549
    %v2366 = vpack.c.b16 %v1558, %v1550
    %v2367 = vpack.c.b16 %v1559, %v1551
    %v2368 = vpack.c.b16 %v1560, %v1552
    %v2369 = vpack.c.b16 %v1561, %v1553
    %v2370 = vpack.c.b16 %v1570, %v1562
    %v2371 = vpack.c.b16 %v1571, %v1563
    %v2372 = vpack.c.b16 %v1572, %v1564
    %v2373 = vpack.c.b16 %v1573, %v1565
    %v2374 = vpack.c.b16 %v1574, %v1566
    %v2375 = vpack.c.b16 %v1575, %v1567
    %v2376 = vpack.c.b16 %v1576, %v1568
    %v2377 = vpack.c.b16 %v1577, %v1569
    %v2378 = vpack.c.b16 %v1586, %v1578
    %v2379 = vpack.c.b16 %v1587, %v1579
    %v2380 = vpack.c.b16 %v1588, %v1580
    %v2381 = vpack.c.b16 %v1589, %v1581
    %v2382 = vpack.c.b16 %v1590, %v1582
    %v2383 = vpack.c.b16 %v1591, %v1583
    %v2384 = vpack.c.b16 %v1592, %v1584
    %v2385 = vpack.c.b16 %v1593, %v1585
    %v2386 = vpack.c.b16 %v1602, %v1594
    %v2387 = vpack.c.b16 %v1603, %v1595
    %v2388 = vpack.c.b16 %v1604, %v1596
    %v2389 = vpack.c.b16 %v1605, %v1597
    %v2390 = vpack.c.b16 %v1606, %v1598
    %v2391 = vpack.c.b16 %v1607, %v1599
    %v2392 = vpack.c.b16 %v1608, %v1600
    %v2393 = vpack.c.b16 %v1609, %v1601
    %v2394 = vpack.c.b16 %v1618, %v1610
    %v2395 = vpack.c.b16 %v1619, %v1611
    %v2396 = vpack.c.b16 %v1620, %v1612
    %v2397 = vpack.c.b16 %v1621, %v1613
    %v2398 = vpack.c.b16 %v1622, %v1614
    %v2399 = vpack.c.b16 %v1623, %v1615
    %v2400 = vpack.c.b16 %v1624, %v1616
    %v2401 = vpack.c.b16 %v1625, %v1617
    %v2402 = vpack.c.b16 %v1634, %v1626
    %v2403 = vpack.c.b16 %v1635, %v1627
    %v2404 = vpack.c.b16 %v1636, %v1628
    %v2405 = vpack.c.b16 %v1637, %v1629
    %v2406 = vpack.c.b16 %v1638, %v1630
    %v2407 = vpack.c.b16 %v1639, %v1631
    %v2408 = vpack.c.b16 %v1640, %v1632
    %v2409 = vpack.c.b16 %v1641, %v1633
    %v2410 = vpack.c.b16 %v1650, %v1642
    %v2411 = vpack.c.b16 %v1651, %v1643
    %v2412 = vpack.c.b16 %v1652, %v1644
    %v2413 = vpack.c.b16 %v1653, %v1645
    %v2414 = vpack.c.b16 %v1654, %v1646
    %v2415 = vpack.c.b16 %v1655, %v1647
    %v2416 = vpack.c.b16 %v1656, %v1648
    %v2417 = vpack.c.b16 %v1657, %v1649
    %v2418 = vpack.c.b16 %v1666, %v1658
    %v2419 = vpack.c.b16 %v1667, %v1659
    %v2420 = vpack.c.b16 %v1668, %v1660
    %v2421 = vpack.c.b16 %v1669, %v1661
    %v2422 = vpack.c.b16 %v1670, %v1662
    %v2423 = vpack.c.b16 %v1671, %v1663
    %v2424 = vpack.c.b16 %v1672, %v1664
    %v2425 = vpack.c.b16 %v1673, %v1665
    %v2426 = vpack.c.b16 %v1682, %v1674
    %v2427 = vpack.c.b16 %v1683, %v1675
    %v2428 = vpack.c.b16 %v1684, %v1676
    %v2429 = vpack.c.b16 %v1685, %v1677
    %v2430 = vpack.c.b16 %v1686, %v1678
    %v2431 = vpack.c.b16 %v1687, %v1679
    %v2432 = vpack.c.b16 %v1688, %v1680
    %v2433 = vpack.c.b16 %v1689, %v1681
    %v2434 = vpack.c.b16 %v1698, %v1690
    %v2435 = vpack.c.b16 %v1699, %v1691
    %v2436 = vpack.c.b16 %v1700, %v1692
    %v2437 = vpack.c.b16 %v1701, %v1693
    %v2438 = vpack.c.b16 %v1702, %v1694
    %v2439 = vpack.c.b16 %v1703, %v1695
    %v2440 = vpack.c.b16 %v1704, %v1696
    %v2441 = vpack.c.b16 %v1705, %v1697
    %v2442 = vpack.c.b16 %v1714, %v1706
    %v2443 = vpack.c.b16 %v1715, %v1707
    %v2444 = vpack.c.b16 %v1716, %v1708
    %v2445 = vpack.c.b16 %v1717, %v1709
    %v2446 = vpack.c.b16 %v1718, %v1710
    %v2447 = vpack.c.b16 %v1719, %v1711
    %v2448 = vpack.c.b16 %v1720, %v1712
    %v2449 = vpack.c.b16 %v1721, %v1713
    %v2450 = vpack.c.b16 %v1730, %v1722
    %v2451 = vpack.c.b16 %v1731, %v1723
    %v2452 = vpack.c.b16 %v1732, %v1724
    %v2453 = vpack.c.b16 %v1733, %v1725
    %v2454 = vpack.c.b16 %v1734, %v1726
    %v2455 = vpack.c.b16 %v1735, %v1727
    %v2456 = vpack.c.b16 %v1736, %v1728
    %v2457 = vpack.c.b16 %v1737, %v1729
    %v2458 = vpack.c.b16 %v1746, %v1738
    %v2459 = vpack.c.b16 %v1747, %v1739
    %v2460 = vpack.c.b16 %v1748, %v1740
    %v2461 = vpack.c.b16 %v1749, %v1741
    %v2462 = vpack.c.b16 %v1750, %v1742
    %v2463 = vpack.c.b16 %v1751, %v1743
    %v2464 = vpack.c.b16 %v1752, %v1744
    %v2465 = vpack.c.b16 %v1753, %v1745
    %v2466 = vpack.c.b16 %v1762, %v1754
    %v2467 = vpack.c.b16 %v1763, %v1755
    %v2468 = vpack.c.b16 %v1764, %v1756
    %v2469 = vpack.c.b16 %v1765, %v1757
    %v2470 = vpack.c.b16 %v1766, %v1758
    %v2471 = vpack.c.b16 %v1767, %v1759
    %v2472 = vpack.c.b16 %v1768, %v1760
    %v2473 = vpack.c.b16 %v1769, %v1761
    %v2474 = vpack.c.b16 %v1778, %v1770
    %v2475 = vpack.c.b16 %v1779, %v1771
    %v2476 = vpack.c.b16 %v1780, %v1772
    %v2477 = vpack.c.b16 %v1781, %v1773
    %v2478 = vpack.c.b16 %v1782, %v1774
    %v2479 = vpack.c.b16 %v1783, %v1775
    %v2480 = vpack.c.b16 %v1784, %v1776
    %v2481 = vpack.c.b16 %v1785, %v1777
    %v2482 = vpack.c.b16 %v1794, %v1786
    %v2483 = vpack.c.b16 %v1795, %v1787
    %v2484 = vpack.c.b16 %v1796, %v1788
    %v2485 = vpack.c.b16 %v1797, %v1789
    %v2486 = vpack.c.b16 %v1798, %v1790
    %v2487 = vpack.c.b16 %v1799, %v1791
    %v2488 = vpack.c.b16 %v1800, %v1792
    %v2489 = vpack.c.b16 %v1801, %v1793
    %v2490 = vpack.c.b16 %v1810, %v1802
    %v2491 = vpack.c.b16 %v1811, %v1803
    %v2492 = vpack.c.b16 %v1812, %v1804
    %v2493 = vpack.c.b16 %v1813, %v1805
    %v2494 = vpack.c.b16 %v1814, %v1806
    %v2495 = vpack.c.b16 %v1815, %v1807
    %v2496 = vpack.c.b16 %v1816, %v1808
    %v2497 = vpack.c.b16 %v1817, %v1809
    %v2498 = vpack.c.b16 %v1826, %v1818
    %v2499 = vpack.c.b16 %v1827, %v1819
    %v2500 = vpack.c.b16 %v1828, %v1820
    %v2501 = vpack.c.b16 %v1829, %v1821
    %v2502 = vpack.c.b16 %v1830, %v1822
    %v2503 = vpack.c.b16 %v1831, %v1823
    %v2504 = vpack.c.b16 %v1832, %v1824
    %v2505 = vpack.c.b16 %v1833, %v1825
    %v2506 = vpack.c.b16 %v1842, %v1834
    %v2507 = vpack.c.b16 %v1843, %v1835
    %v2508 = vpack.c.b16 %v1844, %v1836
    %v2509 = vpack.c.b16 %v1845, %v1837
    %v2510 = vpack.c.b16 %v1846, %v1838
    %v2511 = vpack.c.b16 %v1847, %v1839
    %v2512 = vpack.c.b16 %v1848, %v1840
    %v2513 = vpack.c.b16 %v1849, %v1841
    %v2514 = vpack.c.b16 %v1858, %v1850
    %v2515 = vpack.c.b16 %v1859, %v1851
    %v2516 = vpack.c.b16 %v1860, %v1852
    %v2517 = vpack.c.b16 %v1861, %v1853
    %v2518 = vpack.c.b16 %v1862, %v1854
    %v2519 = vpack.c.b16 %v1863, %v1855
    %v2520 = vpack.c.b16 %v1864, %v1856
    %v2521 = vpack.c.b16 %v1865, %v1857
    %v2522 = vpack.c.b16 %v1874, %v1866
    %v2523 = vpack.c.b16 %v1875, %v1867
    %v2524 = vpack.c.b16 %v1876, %v1868
    %v2525 = vpack.c.b16 %v1877, %v1869
    %v2526 = vpack.c.b16 %v1878, %v1870
    %v2527 = vpack.c.b16 %v1879, %v1871
    %v2528 = vpack.c.b16 %v1880, %v1872
    %v2529 = vpack.c.b16 %v1881, %v1873
    %v2530 = vpack.c.b16 %v1890, %v1882
    %v2531 = vpack.c.b16 %v1891, %v1883
    %v2532 = vpack.c.b16 %v1892, %v1884
    %v2533 = vpack.c.b16 %v1893, %v1885
    %v2534 = vpack.c.b16 %v1894, %v1886
    %v2535 = vpack.c.b16 %v1895, %v1887
    %v2536 = vpack.c.b16 %v1896, %v1888
    %v2537 = vpack.c.b16 %v1897, %v1889
    %v2538 = vpack.c.b16 %v1906, %v1898
    %v2539 = vpack.c.b16 %v1907, %v1899
    %v2540 = vpack.c.b16 %v1908, %v1900
    %v2541 = vpack.c.b16 %v1909, %v1901
    %v2542 = vpack.c.b16 %v1910, %v1902
    %v2543 = vpack.c.b16 %v1911, %v1903
    %v2544 = vpack.c.b16 %v1912, %v1904
    %v2545 = vpack.c.b16 %v1913, %v1905
    %v2546 = vpack.c.b16 %v1922, %v1914
    %v2547 = vpack.c.b16 %v1923, %v1915
    %v2548 = vpack.c.b16 %v1924, %v1916
    %v2549 = vpack.c.b16 %v1925, %v1917
    %v2550 = vpack.c.b16 %v1926, %v1918
    %v2551 = vpack.c.b16 %v1927, %v1919
    %v2552 = vpack.c.b16 %v1928, %v1920
    %v2553 = vpack.c.b16 %v1929, %v1921
    %v2554 = vpack.c.b16 %v1938, %v1930
    %v2555 = vpack.c.b16 %v1939, %v1931
    %v2556 = vpack.c.b16 %v1940, %v1932
    %v2557 = vpack.c.b16 %v1941, %v1933
    %v2558 = vpack.c.b16 %v1942, %v1934
    %v2559 = vpack.c.b16 %v1943, %v1935
    %v2560 = vpack.c.b16 %v1944, %v1936
    %v2561 = vpack.c.b16 %v1945, %v1937
    %v2562 = vpack.c.b16 %v1954, %v1946
    %v2563 = vpack.c.b16 %v1955, %v1947
    %v2564 = vpack.c.b16 %v1956, %v1948
    %v2565 = vpack.c.b16 %v1957, %v1949
    %v2566 = vpack.c.b16 %v1958, %v1950
    %v2567 = vpack.c.b16 %v1959, %v1951
    %v2568 = vpack.c.b16 %v1960, %v1952
    %v2569 = vpack.c.b16 %v1961, %v1953
    %v2570 = vpack.c.b16 %v1970, %v1962
    %v2571 = vpack.c.b16 %v1971, %v1963
    %v2572 = vpack.c.b16 %v1972, %v1964
    %v2573 = vpack.c.b16 %v1973, %v1965
    %v2574 = vpack.c.b16 %v1974, %v1966
    %v2575 = vpack.c.b16 %v1975, %v1967
    %v2576 = vpack.c.b16 %v1976, %v1968
    %v2577 = vpack.c.b16 %v1977, %v1969
    %v2578 = vpack.c.b16 %v1986, %v1978
    %v2579 = vpack.c.b16 %v1987, %v1979
    %v2580 = vpack.c.b16 %v1988, %v1980
    %v2581 = vpack.c.b16 %v1989, %v1981
    %v2582 = vpack.c.b16 %v1990, %v1982
    %v2583 = vpack.c.b16 %v1991, %v1983
    %v2584 = vpack.c.b16 %v1992, %v1984
    %v2585 = vpack.c.b16 %v1993, %v1985
    %v2586 = vpack.c.b16 %v2002, %v1994
    %v2587 = vpack.c.b16 %v2003, %v1995
    %v2588 = vpack.c.b16 %v2004, %v1996
    %v2589 = vpack.c.b16 %v2005, %v1997
    %v2590 = vpack.c.b16 %v2006, %v1998
    %v2591 = vpack.c.b16 %v2007, %v1999
    %v2592 = vpack.c.b16 %v2008, %v2000
    %v2593 = vpack.c.b16 %v2009, %v2001
    %v2594 = vpack.c.b16 %v2018, %v2010
    %v2595 = vpack.c.b16 %v2019, %v2011
    %v2596 = vpack.c.b16 %v2020, %v2012
    %v2597 = vpack.c.b16 %v2021, %v2013
    %v2598 = vpack.c.b16 %v2022, %v2014
    %v2599 = vpack.c.b16 %v2023, %v2015
    %v2600 = vpack.c.b16 %v2024, %v2016
    %v2601 = vpack.c.b16 %v2025, %v2017
    %v2602 = vpack.c.b16 %v2034, %v2026
    %v2603 = vpack.c.b16 %v2035, %v2027
    %v2604 = vpack.c.b16 %v2036, %v2028
    %v2605 = vpack.c.b16 %v2037, %v2029
    %v2606 = vpack.c.b16 %v2038, %v2030
    %v2607 = vpack.c.b16 %v2039, %v2031
    %v2608 = vpack.c.b16 %v2040, %v2032
    %v2609 = vpack.c.b16 %v2041, %v2033
    %v2610 = vpack.c.b16 %v2050, %v2042
    %v2611 = vpack.c.b16 %v2051, %v2043
    %v2612 = vpack.c.b16 %v2052, %v2044
    %v2613 = vpack.c.b16 %v2053, %v2045
    %v2614 = vpack.c.b16 %v2054, %v2046
    %v2615 = vpack.c.b16 %v2055, %v2047
    %v2616 = vpack.c.b16 %v2056, %v2048
    %v2617 = vpack.c.b16 %v2057, %v2049
    %v2618 = vpack.c.b16 %v2066, %v2058
    %v2619 = vpack.c.b16 %v2067, %v2059
    %v2620 = vpack.c.b16 %v2068, %v2060
    %v2621 = vpack.c.b16 %v2069, %v2061
    %v2622 = vpack.c.b16 %v2070, %v2062
    %v2623 = vpack.c.b16 %v2071, %v2063
    %v2624 = vpack.c.b16 %v2072, %v2064
    %v2625 = vpack.c.b16 %v2073, %v2065
    %v2626 = vpack.c.b16 %v2082, %v2074
    %v2627 = vpack.c.b16 %v2083, %v2075
    %v2628 = vpack.c.b16 %v2084, %v2076
    %v2629 = vpack.c.b16 %v2085, %v2077
    %v2630 = vpack.c.b16 %v2086, %v2078
    %v2631 = vpack.c.b16 %v2087, %v2079
    %v2632 = vpack.c.b16 %v2088, %v2080
    %v2633 = vpack.c.b16 %v2089, %v2081
    %v2634 = vpack.c.b16 %v2098, %v2090
    %v2635 = vpack.c.b16 %v2099, %v2091
    %v2636 = vpack.c.b16 %v2100, %v2092
    %v2637 = vpack.c.b16 %v2101, %v2093
    %v2638 = vpack.c.b16 %v2102, %v2094
    %v2639 = vpack.c.b16 %v2103, %v2095
    %v2640 = vpack.c.b16 %v2104, %v2096
    %v2641 = vpack.c.b16 %v2105, %v2097
    %v2642 = vpack.c.b16 %v2114, %v2106
    %v2643 = vpack.c.b16 %v2115, %v2107
    %v2644 = vpack.c.b16 %v2116, %v2108
    %v2645 = vpack.c.b16 %v2117, %v2109
    %v2646 = vpack.c.b16 %v2118, %v2110
    %v2647 = vpack.c.b16 %v2119, %v2111
    %v2648 = vpack.c.b16 %v2120, %v2112
    %v2649 = vpack.c.b16 %v2121, %v2113
    %v2650 = vpack.c.b16 %v2130, %v2122
    %v2651 = vpack.c.b16 %v2131, %v2123
    %v2652 = vpack.c.b16 %v2132, %v2124
    %v2653 = vpack.c.b16 %v2133, %v2125
    %v2654 = vpack.c.b16 %v2134, %v2126
    %v2655 = vpack.c.b16 %v2135, %v2127
    %v2656 = vpack.c.b16 %v2136, %v2128
    %v2657 = vpack.c.b16 %v2137, %v2129
    %v2658 = vpack.c.b16 %v2146, %v2138
    %v2659 = vpack.c.b16 %v2147, %v2139
    %v2660 = vpack.c.b16 %v2148, %v2140
    %v2661 = vpack.c.b16 %v2149, %v2141
    %v2662 = vpack.c.b16 %v2150, %v2142
    %v2663 = vpack.c.b16 %v2151, %v2143
    %v2664 = vpack.c.b16 %v2152, %v2144
    %v2665 = vpack.c.b16 %v2153, %v2145
    %3178 = vmatprep.subr.bf16.mxu0 %v2211
    %3179 = vmatpush1.bf16.msra.mxu0 %v2210
    %3180 = vmatprep.subr.bf16.mxu0 %v2203
    %3181 = vmatpush1.bf16.msra.mxu0 %v2202
    %3182 = vmatprep.subr.bf16.mxu0 %v2195
    %3183 = vmatpush1.bf16.msra.mxu0 %v2194
    %3184 = vmatprep.subr.bf16.mxu0 %v2187
    %3185 = vmatpush1.bf16.msra.mxu0 %v2186
    %3186 = vmatprep.subr.bf16.mxu0 %v2179
    %3187 = vmatpush1.bf16.msra.mxu0 %v2178
    %3188 = vmatprep.subr.bf16.mxu0 %v2171
    %3189 = vmatpush1.bf16.msra.mxu0 %v2170
    %3190 = vmatprep.subr.bf16.mxu0 %v2163
    %3191 = vmatpush1.bf16.msra.mxu0 %v2162
    %3192 = vmatprep.subr.bf16.mxu0 %v2155
    %3193 = vmatpush1.bf16.msra.mxu0 %v2154
    %3194 = vmatprep.subr.bf16.mxu0 %v2275
    %3195 = vmatpush2.bf16.msra.mxu0 %v2274
    %3196 = vmatprep.subr.bf16.mxu0 %v2267
    %3197 = vmatpush2.bf16.msra.mxu0 %v2266
    %3198 = vmatprep.subr.bf16.mxu0 %v2259
    %3199 = vmatpush2.bf16.msra.mxu0 %v2258
    %3200 = vmatprep.subr.bf16.mxu0 %v2251
    %3201 = vmatpush2.bf16.msra.mxu0 %v2250
    %3202 = vmatprep.subr.bf16.mxu0 %v2243
    %3203 = vmatpush2.bf16.msra.mxu0 %v2242
    %3204 = vmatprep.subr.bf16.mxu0 %v2235
    %3205 = vmatpush2.bf16.msra.mxu0 %v2234
    %3206 = vmatprep.subr.bf16.mxu0 %v2227
    %3207 = vmatpush2.bf16.msra.mxu0 %v2226
    %3208 = vmatprep.subr.bf16.mxu0 %v2219
    %3209 = vmatpush2.bf16.msra.mxu0 %v2218
    %3210 = vmatprep.mubr.bf16.mxu0 %v57
    %3211 = vmatmul.mubr.bf16.gmra.mxu0 %v56
    %v3212 = vpop.f32.mrf.mxu0
    %v3213 = vadd.f32 %v581, %v3212
    %v3214 = vpop.f32.mrf.mxu0
    %v3215 = vadd.f32 %v585, %v3214
    %v3216 = vpop.f32.mrf.mxu0
    %v3217 = vadd.f32 %v581, %v3216
    %v3218 = vpop.f32.mrf.mxu0
    %v3219 = vadd.f32 %v585, %v3218
    %3220 = vdwg.mxu0
    %3221 = vmatprep.subr.bf16.mxu0 %v2339
    %3222 = vmatpush1.bf16.msra.mxu0 %v2338
    %3223 = vmatprep.subr.bf16.mxu0 %v2331
    %3224 = vmatpush1.bf16.msra.mxu0 %v2330
    %3225 = vmatprep.subr.bf16.mxu0 %v2323
    %3226 = vmatpush1.bf16.msra.mxu0 %v2322
    %3227 = vmatprep.subr.bf16.mxu0 %v2315
    %3228 = vmatpush1.bf16.msra.mxu0 %v2314
    %3229 = vmatprep.subr.bf16.mxu0 %v2307
    %3230 = vmatpush1.bf16.msra.mxu0 %v2306
    %3231 = vmatprep.subr.bf16.mxu0 %v2299
    %3232 = vmatpush1.bf16.msra.mxu0 %v2298
    %3233 = vmatprep.subr.bf16.mxu0 %v2291
    %3234 = vmatpush1.bf16.msra.mxu0 %v2290
    %3235 = vmatprep.subr.bf16.mxu0 %v2283
    %3236 = vmatpush1.bf16.msra.mxu0 %v2282
    %3237 = vmatprep.subr.bf16.mxu0 %v2403
    %3238 = vmatpush2.bf16.msra.mxu0 %v2402
    %3239 = vmatprep.subr.bf16.mxu0 %v2395
    %3240 = vmatpush2.bf16.msra.mxu0 %v2394
    %3241 = vmatprep.subr.bf16.mxu0 %v2387
    %3242 = vmatpush2.bf16.msra.mxu0 %v2386
    %3243 = vmatprep.subr.bf16.mxu0 %v2379
    %3244 = vmatpush2.bf16.msra.mxu0 %v2378
    %3245 = vmatprep.subr.bf16.mxu0 %v2371
    %3246 = vmatpush2.bf16.msra.mxu0 %v2370
    %3247 = vmatprep.subr.bf16.mxu0 %v2363
    %3248 = vmatpush2.bf16.msra.mxu0 %v2362
    %3249 = vmatprep.subr.bf16.mxu0 %v2355
    %3250 = vmatpush2.bf16.msra.mxu0 %v2354
    %3251 = vmatprep.subr.bf16.mxu0 %v2347
    %3252 = vmatpush2.bf16.msra.mxu0 %v2346
    %3253 = vmatprep.mubr.bf16.mxu0 %v59
    %3254 = vmatmul.mubr.bf16.gmra.mxu0 %v58
    %v3255 = vpop.f32.mrf.mxu0
    %v3256 = vadd.f32 %v3213, %v3255
    %v3257 = vpop.f32.mrf.mxu0
    %v3258 = vadd.f32 %v3215, %v3257
    %v3259 = vpop.f32.mrf.mxu0
    %v3260 = vadd.f32 %v3217, %v3259
    %v3261 = vpop.f32.mrf.mxu0
    %v3262 = vadd.f32 %v3219, %v3261
    %3263 = vdwg.mxu0
    %3264 = vmatprep.subr.bf16.mxu0 %v2467
    %3265 = vmatpush1.bf16.msra.mxu0 %v2466
    %3266 = vmatprep.subr.bf16.mxu0 %v2459
    %3267 = vmatpush1.bf16.msra.mxu0 %v2458
    %3268 = vmatprep.subr.bf16.mxu0 %v2451
    %3269 = vmatpush1.bf16.msra.mxu0 %v2450
    %3270 = vmatprep.subr.bf16.mxu0 %v2443
    %3271 = vmatpush1.bf16.msra.mxu0 %v2442
    %3272 = vmatprep.subr.bf16.mxu0 %v2435
    %3273 = vmatpush1.bf16.msra.mxu0 %v2434
    %3274 = vmatprep.subr.bf16.mxu0 %v2427
    %3275 = vmatpush1.bf16.msra.mxu0 %v2426
    %3276 = vmatprep.subr.bf16.mxu0 %v2419
    %3277 = vmatpush1.bf16.msra.mxu0 %v2418
    %3278 = vmatprep.subr.bf16.mxu0 %v2411
    %3279 = vmatpush1.bf16.msra.mxu0 %v2410
    %3280 = vmatprep.subr.bf16.mxu0 %v2531
    %3281 = vmatpush2.bf16.msra.mxu0 %v2530
    %3282 = vmatprep.subr.bf16.mxu0 %v2523
    %3283 = vmatpush2.bf16.msra.mxu0 %v2522
    %3284 = vmatprep.subr.bf16.mxu0 %v2515
    %3285 = vmatpush2.bf16.msra.mxu0 %v2514
    %3286 = vmatprep.subr.bf16.mxu0 %v2507
    %3287 = vmatpush2.bf16.msra.mxu0 %v2506
    %3288 = vmatprep.subr.bf16.mxu0 %v2499
    %3289 = vmatpush2.bf16.msra.mxu0 %v2498
    %3290 = vmatprep.subr.bf16.mxu0 %v2491
    %3291 = vmatpush2.bf16.msra.mxu0 %v2490
    %3292 = vmatprep.subr.bf16.mxu0 %v2483
    %3293 = vmatpush2.bf16.msra.mxu0 %v2482
    %3294 = vmatprep.subr.bf16.mxu0 %v2475
    %3295 = vmatpush2.bf16.msra.mxu0 %v2474
    %3296 = vmatprep.mubr.bf16.mxu0 %v61
    %3297 = vmatmul.mubr.bf16.gmra.mxu0 %v60
    %v3298 = vpop.f32.mrf.mxu0
    %v3299 = vadd.f32 %v3256, %v3298
    %v3300 = vpop.f32.mrf.mxu0
    %v3301 = vadd.f32 %v3258, %v3300
    %v3302 = vpop.f32.mrf.mxu0
    %v3303 = vadd.f32 %v3260, %v3302
    %v3304 = vpop.f32.mrf.mxu0
    %v3305 = vadd.f32 %v3262, %v3304
    %3306 = vdwg.mxu0
    %3307 = vmatprep.subr.bf16.mxu0 %v2595
    %3308 = vmatpush1.bf16.msra.mxu0 %v2594
    %3309 = vmatprep.subr.bf16.mxu0 %v2587
    %3310 = vmatpush1.bf16.msra.mxu0 %v2586
    %3311 = vmatprep.subr.bf16.mxu0 %v2579
    %3312 = vmatpush1.bf16.msra.mxu0 %v2578
    %3313 = vmatprep.subr.bf16.mxu0 %v2571
    %3314 = vmatpush1.bf16.msra.mxu0 %v2570
    %3315 = vmatprep.subr.bf16.mxu0 %v2563
    %3316 = vmatpush1.bf16.msra.mxu0 %v2562
    %3317 = vmatprep.subr.bf16.mxu0 %v2555
    %3318 = vmatpush1.bf16.msra.mxu0 %v2554
    %3319 = vmatprep.subr.bf16.mxu0 %v2547
    %3320 = vmatpush1.bf16.msra.mxu0 %v2546
    %3321 = vmatprep.subr.bf16.mxu0 %v2539
    %3322 = vmatpush1.bf16.msra.mxu0 %v2538
    %3323 = vmatprep.subr.bf16.mxu0 %v2659
    %3324 = vmatpush2.bf16.msra.mxu0 %v2658
    %3325 = vmatprep.subr.bf16.mxu0 %v2651
    %3326 = vmatpush2.bf16.msra.mxu0 %v2650
    %3327 = vmatprep.subr.bf16.mxu0 %v2643
    %3328 = vmatpush2.bf16.msra.mxu0 %v2642
    %3329 = vmatprep.subr.bf16.mxu0 %v2635
    %3330 = vmatpush2.bf16.msra.mxu0 %v2634
    %3331 = vmatprep.subr.bf16.mxu0 %v2627
    %3332 = vmatpush2.bf16.msra.mxu0 %v2626
    %3333 = vmatprep.subr.bf16.mxu0 %v2619
    %3334 = vmatpush2.bf16.msra.mxu0 %v2618
    %3335 = vmatprep.subr.bf16.mxu0 %v2611
    %3336 = vmatpush2.bf16.msra.mxu0 %v2610
    %3337 = vmatprep.subr.bf16.mxu0 %v2603
    %3338 = vmatpush2.bf16.msra.mxu0 %v2602
    %3339 = vmatprep.mubr.bf16.mxu0 %v63
    %3340 = vmatmul.mubr.bf16.gmra.mxu0 %v62
    %v3341 = vpop.f32.mrf.mxu0
    %v3342 = vadd.f32 %v3299, %v3341
    %v3343 = vpop.f32.mrf.mxu0
    %v3344 = vadd.f32 %v3301, %v3343
    %v3345 = vpop.f32.mrf.mxu0
    %v3346 = vadd.f32 %v3303, %v3345
    %v3347 = vpop.f32.mrf.mxu0
    %v3348 = vadd.f32 %v3305, %v3347
    %3349 = vdwg.mxu0
    %3350 = vmatprep.subr.bf16.mxu0 %v2213
    %3351 = vmatpush1.bf16.msra.mxu0 %v2212
    %3352 = vmatprep.subr.bf16.mxu0 %v2205
    %3353 = vmatpush1.bf16.msra.mxu0 %v2204
    %3354 = vmatprep.subr.bf16.mxu0 %v2197
    %3355 = vmatpush1.bf16.msra.mxu0 %v2196
    %3356 = vmatprep.subr.bf16.mxu0 %v2189
    %3357 = vmatpush1.bf16.msra.mxu0 %v2188
    %3358 = vmatprep.subr.bf16.mxu0 %v2181
    %3359 = vmatpush1.bf16.msra.mxu0 %v2180
    %3360 = vmatprep.subr.bf16.mxu0 %v2173
    %3361 = vmatpush1.bf16.msra.mxu0 %v2172
    %3362 = vmatprep.subr.bf16.mxu0 %v2165
    %3363 = vmatpush1.bf16.msra.mxu0 %v2164
    %3364 = vmatprep.subr.bf16.mxu0 %v2157
    %3365 = vmatpush1.bf16.msra.mxu0 %v2156
    %3366 = vmatprep.subr.bf16.mxu0 %v2277
    %3367 = vmatpush2.bf16.msra.mxu0 %v2276
    %3368 = vmatprep.subr.bf16.mxu0 %v2269
    %3369 = vmatpush2.bf16.msra.mxu0 %v2268
    %3370 = vmatprep.subr.bf16.mxu0 %v2261
    %3371 = vmatpush2.bf16.msra.mxu0 %v2260
    %3372 = vmatprep.subr.bf16.mxu0 %v2253
    %3373 = vmatpush2.bf16.msra.mxu0 %v2252
    %3374 = vmatprep.subr.bf16.mxu0 %v2245
    %3375 = vmatpush2.bf16.msra.mxu0 %v2244
    %3376 = vmatprep.subr.bf16.mxu0 %v2237
    %3377 = vmatpush2.bf16.msra.mxu0 %v2236
    %3378 = vmatprep.subr.bf16.mxu0 %v2229
    %3379 = vmatpush2.bf16.msra.mxu0 %v2228
    %3380 = vmatprep.subr.bf16.mxu0 %v2221
    %3381 = vmatpush2.bf16.msra.mxu0 %v2220
    %3382 = vmatprep.mubr.bf16.mxu0 %v57
    %3383 = vmatmul.mubr.bf16.gmra.mxu0 %v56
    %v3384 = vpop.f32.mrf.mxu0
    %v3385 = vadd.f32 %v589, %v3384
    %v3386 = vpop.f32.mrf.mxu0
    %v3387 = vadd.f32 %v593, %v3386
    %v3388 = vpop.f32.mrf.mxu0
    %v3389 = vadd.f32 %v589, %v3388
    %v3390 = vpop.f32.mrf.mxu0
    %v3391 = vadd.f32 %v593, %v3390
    %3392 = vdwg.mxu0
    %3393 = vmatprep.subr.bf16.mxu0 %v2341
    %3394 = vmatpush1.bf16.msra.mxu0 %v2340
    %3395 = vmatprep.subr.bf16.mxu0 %v2333
    %3396 = vmatpush1.bf16.msra.mxu0 %v2332
    %3397 = vmatprep.subr.bf16.mxu0 %v2325
    %3398 = vmatpush1.bf16.msra.mxu0 %v2324
    %3399 = vmatprep.subr.bf16.mxu0 %v2317
    %3400 = vmatpush1.bf16.msra.mxu0 %v2316
    %3401 = vmatprep.subr.bf16.mxu0 %v2309
    %3402 = vmatpush1.bf16.msra.mxu0 %v2308
    %3403 = vmatprep.subr.bf16.mxu0 %v2301
    %3404 = vmatpush1.bf16.msra.mxu0 %v2300
    %3405 = vmatprep.subr.bf16.mxu0 %v2293
    %3406 = vmatpush1.bf16.msra.mxu0 %v2292
    %3407 = vmatprep.subr.bf16.mxu0 %v2285
    %3408 = vmatpush1.bf16.msra.mxu0 %v2284
    %3409 = vmatprep.subr.bf16.mxu0 %v2405
    %3410 = vmatpush2.bf16.msra.mxu0 %v2404
    %3411 = vmatprep.subr.bf16.mxu0 %v2397
    %3412 = vmatpush2.bf16.msra.mxu0 %v2396
    %3413 = vmatprep.subr.bf16.mxu0 %v2389
    %3414 = vmatpush2.bf16.msra.mxu0 %v2388
    %3415 = vmatprep.subr.bf16.mxu0 %v2381
    %3416 = vmatpush2.bf16.msra.mxu0 %v2380
    %3417 = vmatprep.subr.bf16.mxu0 %v2373
    %3418 = vmatpush2.bf16.msra.mxu0 %v2372
    %3419 = vmatprep.subr.bf16.mxu0 %v2365
    %3420 = vmatpush2.bf16.msra.mxu0 %v2364
    %3421 = vmatprep.subr.bf16.mxu0 %v2357
    %3422 = vmatpush2.bf16.msra.mxu0 %v2356
    %3423 = vmatprep.subr.bf16.mxu0 %v2349
    %3424 = vmatpush2.bf16.msra.mxu0 %v2348
    %3425 = vmatprep.mubr.bf16.mxu0 %v59
    %3426 = vmatmul.mubr.bf16.gmra.mxu0 %v58
    %v3427 = vpop.f32.mrf.mxu0
    %v3428 = vadd.f32 %v3385, %v3427
    %v3429 = vpop.f32.mrf.mxu0
    %v3430 = vadd.f32 %v3387, %v3429
    %v3431 = vpop.f32.mrf.mxu0
    %v3432 = vadd.f32 %v3389, %v3431
    %v3433 = vpop.f32.mrf.mxu0
    %v3434 = vadd.f32 %v3391, %v3433
    %3435 = vdwg.mxu0
    %3436 = vmatprep.subr.bf16.mxu0 %v2469
    %3437 = vmatpush1.bf16.msra.mxu0 %v2468
    %3438 = vmatprep.subr.bf16.mxu0 %v2461
    %3439 = vmatpush1.bf16.msra.mxu0 %v2460
    %3440 = vmatprep.subr.bf16.mxu0 %v2453
    %3441 = vmatpush1.bf16.msra.mxu0 %v2452
    %3442 = vmatprep.subr.bf16.mxu0 %v2445
    %3443 = vmatpush1.bf16.msra.mxu0 %v2444
    %3444 = vmatprep.subr.bf16.mxu0 %v2437
    %3445 = vmatpush1.bf16.msra.mxu0 %v2436
    %3446 = vmatprep.subr.bf16.mxu0 %v2429
    %3447 = vmatpush1.bf16.msra.mxu0 %v2428
    %3448 = vmatprep.subr.bf16.mxu0 %v2421
    %3449 = vmatpush1.bf16.msra.mxu0 %v2420
    %3450 = vmatprep.subr.bf16.mxu0 %v2413
    %3451 = vmatpush1.bf16.msra.mxu0 %v2412
    %3452 = vmatprep.subr.bf16.mxu0 %v2533
    %3453 = vmatpush2.bf16.msra.mxu0 %v2532
    %3454 = vmatprep.subr.bf16.mxu0 %v2525
    %3455 = vmatpush2.bf16.msra.mxu0 %v2524
    %3456 = vmatprep.subr.bf16.mxu0 %v2517
    %3457 = vmatpush2.bf16.msra.mxu0 %v2516
    %3458 = vmatprep.subr.bf16.mxu0 %v2509
    %3459 = vmatpush2.bf16.msra.mxu0 %v2508
    %3460 = vmatprep.subr.bf16.mxu0 %v2501
    %3461 = vmatpush2.bf16.msra.mxu0 %v2500
    %3462 = vmatprep.subr.bf16.mxu0 %v2493
    %3463 = vmatpush2.bf16.msra.mxu0 %v2492
    %3464 = vmatprep.subr.bf16.mxu0 %v2485
    %3465 = vmatpush2.bf16.msra.mxu0 %v2484
    %3466 = vmatprep.subr.bf16.mxu0 %v2477
    %3467 = vmatpush2.bf16.msra.mxu0 %v2476
    %3468 = vmatprep.mubr.bf16.mxu0 %v61
    %3469 = vmatmul.mubr.bf16.gmra.mxu0 %v60
    %v3470 = vpop.f32.mrf.mxu0
    %v3471 = vadd.f32 %v3428, %v3470
    %v3472 = vpop.f32.mrf.mxu0
    %v3473 = vadd.f32 %v3430, %v3472
    %v3474 = vpop.f32.mrf.mxu0
    %v3475 = vadd.f32 %v3432, %v3474
    %v3476 = vpop.f32.mrf.mxu0
    %v3477 = vadd.f32 %v3434, %v3476
    %3478 = vdwg.mxu0
    %3479 = vmatprep.subr.bf16.mxu0 %v2597
    %3480 = vmatpush1.bf16.msra.mxu0 %v2596
    %3481 = vmatprep.subr.bf16.mxu0 %v2589
    %3482 = vmatpush1.bf16.msra.mxu0 %v2588
    %3483 = vmatprep.subr.bf16.mxu0 %v2581
    %3484 = vmatpush1.bf16.msra.mxu0 %v2580
    %3485 = vmatprep.subr.bf16.mxu0 %v2573
    %3486 = vmatpush1.bf16.msra.mxu0 %v2572
    %3487 = vmatprep.subr.bf16.mxu0 %v2565
    %3488 = vmatpush1.bf16.msra.mxu0 %v2564
    %3489 = vmatprep.subr.bf16.mxu0 %v2557
    %3490 = vmatpush1.bf16.msra.mxu0 %v2556
    %3491 = vmatprep.subr.bf16.mxu0 %v2549
    %3492 = vmatpush1.bf16.msra.mxu0 %v2548
    %3493 = vmatprep.subr.bf16.mxu0 %v2541
    %3494 = vmatpush1.bf16.msra.mxu0 %v2540
    %3495 = vmatprep.subr.bf16.mxu0 %v2661
    %3496 = vmatpush2.bf16.msra.mxu0 %v2660
    %3497 = vmatprep.subr.bf16.mxu0 %v2653
    %3498 = vmatpush2.bf16.msra.mxu0 %v2652
    %3499 = vmatprep.subr.bf16.mxu0 %v2645
    %3500 = vmatpush2.bf16.msra.mxu0 %v2644
    %3501 = vmatprep.subr.bf16.mxu0 %v2637
    %3502 = vmatpush2.bf16.msra.mxu0 %v2636
    %3503 = vmatprep.subr.bf16.mxu0 %v2629
    %3504 = vmatpush2.bf16.msra.mxu0 %v2628
    %3505 = vmatprep.subr.bf16.mxu0 %v2621
    %3506 = vmatpush2.bf16.msra.mxu0 %v2620
    %3507 = vmatprep.subr.bf16.mxu0 %v2613
    %3508 = vmatpush2.bf16.msra.mxu0 %v2612
    %3509 = vmatprep.subr.bf16.mxu0 %v2605
    %3510 = vmatpush2.bf16.msra.mxu0 %v2604
    %3511 = vmatprep.mubr.bf16.mxu0 %v63
    %3512 = vmatmul.mubr.bf16.gmra.mxu0 %v62
    %v3513 = vpop.f32.mrf.mxu0
    %v3514 = vadd.f32 %v3471, %v3513
    %v3515 = vpop.f32.mrf.mxu0
    %v3516 = vadd.f32 %v3473, %v3515
    %v3517 = vpop.f32.mrf.mxu0
    %v3518 = vadd.f32 %v3475, %v3517
    %v3519 = vpop.f32.mrf.mxu0
    %v3520 = vadd.f32 %v3477, %v3519
    %3521 = vdwg.mxu0
    %3522 = vmatprep.subr.bf16.mxu0 %v2215
    %3523 = vmatpush1.bf16.msra.mxu0 %v2214
    %3524 = vmatprep.subr.bf16.mxu0 %v2207
    %3525 = vmatpush1.bf16.msra.mxu0 %v2206
    %3526 = vmatprep.subr.bf16.mxu0 %v2199
    %3527 = vmatpush1.bf16.msra.mxu0 %v2198
    %3528 = vmatprep.subr.bf16.mxu0 %v2191
    %3529 = vmatpush1.bf16.msra.mxu0 %v2190
    %3530 = vmatprep.subr.bf16.mxu0 %v2183
    %3531 = vmatpush1.bf16.msra.mxu0 %v2182
    %3532 = vmatprep.subr.bf16.mxu0 %v2175
    %3533 = vmatpush1.bf16.msra.mxu0 %v2174
    %3534 = vmatprep.subr.bf16.mxu0 %v2167
    %3535 = vmatpush1.bf16.msra.mxu0 %v2166
    %3536 = vmatprep.subr.bf16.mxu0 %v2159
    %3537 = vmatpush1.bf16.msra.mxu0 %v2158
    %3538 = vmatprep.subr.bf16.mxu0 %v2279
    %3539 = vmatpush2.bf16.msra.mxu0 %v2278
    %3540 = vmatprep.subr.bf16.mxu0 %v2271
    %3541 = vmatpush2.bf16.msra.mxu0 %v2270
    %3542 = vmatprep.subr.bf16.mxu0 %v2263
    %3543 = vmatpush2.bf16.msra.mxu0 %v2262
    %3544 = vmatprep.subr.bf16.mxu0 %v2255
    %3545 = vmatpush2.bf16.msra.mxu0 %v2254
    %3546 = vmatprep.subr.bf16.mxu0 %v2247
    %3547 = vmatpush2.bf16.msra.mxu0 %v2246
    %3548 = vmatprep.subr.bf16.mxu0 %v2239
    %3549 = vmatpush2.bf16.msra.mxu0 %v2238
    %3550 = vmatprep.subr.bf16.mxu0 %v2231
    %3551 = vmatpush2.bf16.msra.mxu0 %v2230
    %3552 = vmatprep.subr.bf16.mxu0 %v2223
    %3553 = vmatpush2.bf16.msra.mxu0 %v2222
    %3554 = vmatprep.mubr.bf16.mxu0 %v57
    %3555 = vmatmul.mubr.bf16.gmra.mxu0 %v56
    %v3556 = vpop.f32.mrf.mxu0
    %v3557 = vadd.f32 %v597, %v3556
    %v3558 = vpop.f32.mrf.mxu0
    %v3559 = vadd.f32 %v601, %v3558
    %v3560 = vpop.f32.mrf.mxu0
    %v3561 = vadd.f32 %v597, %v3560
    %v3562 = vpop.f32.mrf.mxu0
    %v3563 = vadd.f32 %v601, %v3562
    %3564 = vdwg.mxu0
    %3565 = vmatprep.subr.bf16.mxu0 %v2343
    %3566 = vmatpush1.bf16.msra.mxu0 %v2342
    %3567 = vmatprep.subr.bf16.mxu0 %v2335
    %3568 = vmatpush1.bf16.msra.mxu0 %v2334
    %3569 = vmatprep.subr.bf16.mxu0 %v2327
    %3570 = vmatpush1.bf16.msra.mxu0 %v2326
    %3571 = vmatprep.subr.bf16.mxu0 %v2319
    %3572 = vmatpush1.bf16.msra.mxu0 %v2318
    %3573 = vmatprep.subr.bf16.mxu0 %v2311
    %3574 = vmatpush1.bf16.msra.mxu0 %v2310
    %3575 = vmatprep.subr.bf16.mxu0 %v2303
    %3576 = vmatpush1.bf16.msra.mxu0 %v2302
    %3577 = vmatprep.subr.bf16.mxu0 %v2295
    %3578 = vmatpush1.bf16.msra.mxu0 %v2294
    %3579 = vmatprep.subr.bf16.mxu0 %v2287
    %3580 = vmatpush1.bf16.msra.mxu0 %v2286
    %3581 = vmatprep.subr.bf16.mxu0 %v2407
    %3582 = vmatpush2.bf16.msra.mxu0 %v2406
    %3583 = vmatprep.subr.bf16.mxu0 %v2399
    %3584 = vmatpush2.bf16.msra.mxu0 %v2398
    %3585 = vmatprep.subr.bf16.mxu0 %v2391
    %3586 = vmatpush2.bf16.msra.mxu0 %v2390
    %3587 = vmatprep.subr.bf16.mxu0 %v2383
    %3588 = vmatpush2.bf16.msra.mxu0 %v2382
    %3589 = vmatprep.subr.bf16.mxu0 %v2375
    %3590 = vmatpush2.bf16.msra.mxu0 %v2374
    %3591 = vmatprep.subr.bf16.mxu0 %v2367
    %3592 = vmatpush2.bf16.msra.mxu0 %v2366
    %3593 = vmatprep.subr.bf16.mxu0 %v2359
    %3594 = vmatpush2.bf16.msra.mxu0 %v2358
    %3595 = vmatprep.subr.bf16.mxu0 %v2351
    %3596 = vmatpush2.bf16.msra.mxu0 %v2350
    %3597 = vmatprep.mubr.bf16.mxu0 %v59
    %3598 = vmatmul.mubr.bf16.gmra.mxu0 %v58
    %v3599 = vpop.f32.mrf.mxu0
    %v3600 = vadd.f32 %v3557, %v3599
    %v3601 = vpop.f32.mrf.mxu0
    %v3602 = vadd.f32 %v3559, %v3601
    %v3603 = vpop.f32.mrf.mxu0
    %v3604 = vadd.f32 %v3561, %v3603
    %v3605 = vpop.f32.mrf.mxu0
    %v3606 = vadd.f32 %v3563, %v3605
    %3607 = vdwg.mxu0
    %3608 = vmatprep.subr.bf16.mxu0 %v2471
    %3609 = vmatpush1.bf16.msra.mxu0 %v2470
    %3610 = vmatprep.subr.bf16.mxu0 %v2463
    %3611 = vmatpush1.bf16.msra.mxu0 %v2462
    %3612 = vmatprep.subr.bf16.mxu0 %v2455
    %3613 = vmatpush1.bf16.msra.mxu0 %v2454
    %3614 = vmatprep.subr.bf16.mxu0 %v2447
    %3615 = vmatpush1.bf16.msra.mxu0 %v2446
    %3616 = vmatprep.subr.bf16.mxu0 %v2439
    %3617 = vmatpush1.bf16.msra.mxu0 %v2438
    %3618 = vmatprep.subr.bf16.mxu0 %v2431
    %3619 = vmatpush1.bf16.msra.mxu0 %v2430
    %3620 = vmatprep.subr.bf16.mxu0 %v2423
    %3621 = vmatpush1.bf16.msra.mxu0 %v2422
    %3622 = vmatprep.subr.bf16.mxu0 %v2415
    %3623 = vmatpush1.bf16.msra.mxu0 %v2414
    %3624 = vmatprep.subr.bf16.mxu0 %v2535
    %3625 = vmatpush2.bf16.msra.mxu0 %v2534
    %3626 = vmatprep.subr.bf16.mxu0 %v2527
    %3627 = vmatpush2.bf16.msra.mxu0 %v2526
    %3628 = vmatprep.subr.bf16.mxu0 %v2519
    %3629 = vmatpush2.bf16.msra.mxu0 %v2518
    %3630 = vmatprep.subr.bf16.mxu0 %v2511
    %3631 = vmatpush2.bf16.msra.mxu0 %v2510
    %3632 = vmatprep.subr.bf16.mxu0 %v2503
    %3633 = vmatpush2.bf16.msra.mxu0 %v2502
    %3634 = vmatprep.subr.bf16.mxu0 %v2495
    %3635 = vmatpush2.bf16.msra.mxu0 %v2494
    %3636 = vmatprep.subr.bf16.mxu0 %v2487
    %3637 = vmatpush2.bf16.msra.mxu0 %v2486
    %3638 = vmatprep.subr.bf16.mxu0 %v2479
    %3639 = vmatpush2.bf16.msra.mxu0 %v2478
    %3640 = vmatprep.mubr.bf16.mxu0 %v61
    %3641 = vmatmul.mubr.bf16.gmra.mxu0 %v60
    %v3642 = vpop.f32.mrf.mxu0
    %v3643 = vadd.f32 %v3600, %v3642
    %v3644 = vpop.f32.mrf.mxu0
    %v3645 = vadd.f32 %v3602, %v3644
    %v3646 = vpop.f32.mrf.mxu0
    %v3647 = vadd.f32 %v3604, %v3646
    %v3648 = vpop.f32.mrf.mxu0
    %v3649 = vadd.f32 %v3606, %v3648
    %3650 = vdwg.mxu0
    %3651 = vmatprep.subr.bf16.mxu0 %v2599
    %3652 = vmatpush1.bf16.msra.mxu0 %v2598
    %3653 = vmatprep.subr.bf16.mxu0 %v2591
    %3654 = vmatpush1.bf16.msra.mxu0 %v2590
    %3655 = vmatprep.subr.bf16.mxu0 %v2583
    %3656 = vmatpush1.bf16.msra.mxu0 %v2582
    %3657 = vmatprep.subr.bf16.mxu0 %v2575
    %3658 = vmatpush1.bf16.msra.mxu0 %v2574
    %3659 = vmatprep.subr.bf16.mxu0 %v2567
    %3660 = vmatpush1.bf16.msra.mxu0 %v2566
    %3661 = vmatprep.subr.bf16.mxu0 %v2559
    %3662 = vmatpush1.bf16.msra.mxu0 %v2558
    %3663 = vmatprep.subr.bf16.mxu0 %v2551
    %3664 = vmatpush1.bf16.msra.mxu0 %v2550
    %3665 = vmatprep.subr.bf16.mxu0 %v2543
    %3666 = vmatpush1.bf16.msra.mxu0 %v2542
    %3667 = vmatprep.subr.bf16.mxu0 %v2663
    %3668 = vmatpush2.bf16.msra.mxu0 %v2662
    %3669 = vmatprep.subr.bf16.mxu0 %v2655
    %3670 = vmatpush2.bf16.msra.mxu0 %v2654
    %3671 = vmatprep.subr.bf16.mxu0 %v2647
    %3672 = vmatpush2.bf16.msra.mxu0 %v2646
    %3673 = vmatprep.subr.bf16.mxu0 %v2639
    %3674 = vmatpush2.bf16.msra.mxu0 %v2638
    %3675 = vmatprep.subr.bf16.mxu0 %v2631
    %3676 = vmatpush2.bf16.msra.mxu0 %v2630
    %3677 = vmatprep.subr.bf16.mxu0 %v2623
    %3678 = vmatpush2.bf16.msra.mxu0 %v2622
    %3679 = vmatprep.subr.bf16.mxu0 %v2615
    %3680 = vmatpush2.bf16.msra.mxu0 %v2614
    %3681 = vmatprep.subr.bf16.mxu0 %v2607
    %3682 = vmatpush2.bf16.msra.mxu0 %v2606
    %3683 = vmatprep.mubr.bf16.mxu0 %v63
    %3684 = vmatmul.mubr.bf16.gmra.mxu0 %v62
    %v3685 = vpop.f32.mrf.mxu0
    %v3686 = vadd.f32 %v3643, %v3685
    %v3687 = vpop.f32.mrf.mxu0
    %v3688 = vadd.f32 %v3645, %v3687
    %v3689 = vpop.f32.mrf.mxu0
    %v3690 = vadd.f32 %v3647, %v3689
    %v3691 = vpop.f32.mrf.mxu0
    %v3692 = vadd.f32 %v3649, %v3691
    %3693 = vdwg.mxu0
    %3694 = vmatprep.subr.bf16.mxu0 %v2217
    %3695 = vmatpush1.bf16.msra.mxu0 %v2216
    %3696 = vmatprep.subr.bf16.mxu0 %v2209
    %3697 = vmatpush1.bf16.msra.mxu0 %v2208
    %3698 = vmatprep.subr.bf16.mxu0 %v2201
    %3699 = vmatpush1.bf16.msra.mxu0 %v2200
    %3700 = vmatprep.subr.bf16.mxu0 %v2193
    %3701 = vmatpush1.bf16.msra.mxu0 %v2192
    %3702 = vmatprep.subr.bf16.mxu0 %v2185
    %3703 = vmatpush1.bf16.msra.mxu0 %v2184
    %3704 = vmatprep.subr.bf16.mxu0 %v2177
    %3705 = vmatpush1.bf16.msra.mxu0 %v2176
    %3706 = vmatprep.subr.bf16.mxu0 %v2169
    %3707 = vmatpush1.bf16.msra.mxu0 %v2168
    %3708 = vmatprep.subr.bf16.mxu0 %v2161
    %3709 = vmatpush1.bf16.msra.mxu0 %v2160
    %3710 = vmatprep.subr.bf16.mxu0 %v2281
    %3711 = vmatpush2.bf16.msra.mxu0 %v2280
    %3712 = vmatprep.subr.bf16.mxu0 %v2273
    %3713 = vmatpush2.bf16.msra.mxu0 %v2272
    %3714 = vmatprep.subr.bf16.mxu0 %v2265
    %3715 = vmatpush2.bf16.msra.mxu0 %v2264
    %3716 = vmatprep.subr.bf16.mxu0 %v2257
    %3717 = vmatpush2.bf16.msra.mxu0 %v2256
    %3718 = vmatprep.subr.bf16.mxu0 %v2249
    %3719 = vmatpush2.bf16.msra.mxu0 %v2248
    %3720 = vmatprep.subr.bf16.mxu0 %v2241
    %3721 = vmatpush2.bf16.msra.mxu0 %v2240
    %3722 = vmatprep.subr.bf16.mxu0 %v2233
    %3723 = vmatpush2.bf16.msra.mxu0 %v2232
    %3724 = vmatprep.subr.bf16.mxu0 %v2225
    %3725 = vmatpush2.bf16.msra.mxu0 %v2224
    %3726 = vmatprep.mubr.bf16.mxu0 %v57
    %3727 = vmatmul.mubr.bf16.gmra.mxu0 %v56
    %v3728 = vpop.f32.mrf.mxu0
    %v3729 = vadd.f32 %v605, %v3728
    %v3730 = vpop.f32.mrf.mxu0
    %v3731 = vadd.f32 %v609, %v3730
    %v3732 = vpop.f32.mrf.mxu0
    %v3733 = vadd.f32 %v605, %v3732
    %v3734 = vpop.f32.mrf.mxu0
    %v3735 = vadd.f32 %v609, %v3734
    %3736 = vdwg.mxu0
    %3737 = vmatprep.subr.bf16.mxu0 %v2345
    %3738 = vmatpush1.bf16.msra.mxu0 %v2344
    %3739 = vmatprep.subr.bf16.mxu0 %v2337
    %3740 = vmatpush1.bf16.msra.mxu0 %v2336
    %3741 = vmatprep.subr.bf16.mxu0 %v2329
    %3742 = vmatpush1.bf16.msra.mxu0 %v2328
    %3743 = vmatprep.subr.bf16.mxu0 %v2321
    %3744 = vmatpush1.bf16.msra.mxu0 %v2320
    %3745 = vmatprep.subr.bf16.mxu0 %v2313
    %3746 = vmatpush1.bf16.msra.mxu0 %v2312
    %3747 = vmatprep.subr.bf16.mxu0 %v2305
    %3748 = vmatpush1.bf16.msra.mxu0 %v2304
    %3749 = vmatprep.subr.bf16.mxu0 %v2297
    %3750 = vmatpush1.bf16.msra.mxu0 %v2296
    %3751 = vmatprep.subr.bf16.mxu0 %v2289
    %3752 = vmatpush1.bf16.msra.mxu0 %v2288
    %3753 = vmatprep.subr.bf16.mxu0 %v2409
    %3754 = vmatpush2.bf16.msra.mxu0 %v2408
    %3755 = vmatprep.subr.bf16.mxu0 %v2401
    %3756 = vmatpush2.bf16.msra.mxu0 %v2400
    %3757 = vmatprep.subr.bf16.mxu0 %v2393
    %3758 = vmatpush2.bf16.msra.mxu0 %v2392
    %3759 = vmatprep.subr.bf16.mxu0 %v2385
    %3760 = vmatpush2.bf16.msra.mxu0 %v2384
    %3761 = vmatprep.subr.bf16.mxu0 %v2377
    %3762 = vmatpush2.bf16.msra.mxu0 %v2376
    %3763 = vmatprep.subr.bf16.mxu0 %v2369
    %3764 = vmatpush2.bf16.msra.mxu0 %v2368
    %3765 = vmatprep.subr.bf16.mxu0 %v2361
    %3766 = vmatpush2.bf16.msra.mxu0 %v2360
    %3767 = vmatprep.subr.bf16.mxu0 %v2353
    %3768 = vmatpush2.bf16.msra.mxu0 %v2352
    %3769 = vmatprep.mubr.bf16.mxu0 %v59
    %3770 = vmatmul.mubr.bf16.gmra.mxu0 %v58
    %v3771 = vpop.f32.mrf.mxu0
    %v3772 = vadd.f32 %v3729, %v3771
    %v3773 = vpop.f32.mrf.mxu0
    %v3774 = vadd.f32 %v3731, %v3773
    %v3775 = vpop.f32.mrf.mxu0
    %v3776 = vadd.f32 %v3733, %v3775
    %v3777 = vpop.f32.mrf.mxu0
    %v3778 = vadd.f32 %v3735, %v3777
    %3779 = vdwg.mxu0
    %3780 = vmatprep.subr.bf16.mxu0 %v2473
    %3781 = vmatpush1.bf16.msra.mxu0 %v2472
    %3782 = vmatprep.subr.bf16.mxu0 %v2465
    %3783 = vmatpush1.bf16.msra.mxu0 %v2464
    %3784 = vmatprep.subr.bf16.mxu0 %v2457
    %3785 = vmatpush1.bf16.msra.mxu0 %v2456
    %3786 = vmatprep.subr.bf16.mxu0 %v2449
    %3787 = vmatpush1.bf16.msra.mxu0 %v2448
    %3788 = vmatprep.subr.bf16.mxu0 %v2441
    %3789 = vmatpush1.bf16.msra.mxu0 %v2440
    %3790 = vmatprep.subr.bf16.mxu0 %v2433
    %3791 = vmatpush1.bf16.msra.mxu0 %v2432
    %3792 = vmatprep.subr.bf16.mxu0 %v2425
    %3793 = vmatpush1.bf16.msra.mxu0 %v2424
    %3794 = vmatprep.subr.bf16.mxu0 %v2417
    %3795 = vmatpush1.bf16.msra.mxu0 %v2416
    %3796 = vmatprep.subr.bf16.mxu0 %v2537
    %3797 = vmatpush2.bf16.msra.mxu0 %v2536
    %3798 = vmatprep.subr.bf16.mxu0 %v2529
    %3799 = vmatpush2.bf16.msra.mxu0 %v2528
    %3800 = vmatprep.subr.bf16.mxu0 %v2521
    %3801 = vmatpush2.bf16.msra.mxu0 %v2520
    %3802 = vmatprep.subr.bf16.mxu0 %v2513
    %3803 = vmatpush2.bf16.msra.mxu0 %v2512
    %3804 = vmatprep.subr.bf16.mxu0 %v2505
    %3805 = vmatpush2.bf16.msra.mxu0 %v2504
    %3806 = vmatprep.subr.bf16.mxu0 %v2497
    %3807 = vmatpush2.bf16.msra.mxu0 %v2496
    %3808 = vmatprep.subr.bf16.mxu0 %v2489
    %3809 = vmatpush2.bf16.msra.mxu0 %v2488
    %3810 = vmatprep.subr.bf16.mxu0 %v2481
    %3811 = vmatpush2.bf16.msra.mxu0 %v2480
    %3812 = vmatprep.mubr.bf16.mxu0 %v61
    %3813 = vmatmul.mubr.bf16.gmra.mxu0 %v60
    %v3814 = vpop.f32.mrf.mxu0
    %v3815 = vadd.f32 %v3772, %v3814
    %v3816 = vpop.f32.mrf.mxu0
    %v3817 = vadd.f32 %v3774, %v3816
    %v3818 = vpop.f32.mrf.mxu0
    %v3819 = vadd.f32 %v3776, %v3818
    %v3820 = vpop.f32.mrf.mxu0
    %v3821 = vadd.f32 %v3778, %v3820
    %3822 = vdwg.mxu0
    %3823 = vmatprep.subr.bf16.mxu0 %v2601
    %3824 = vmatpush1.bf16.msra.mxu0 %v2600
    %3825 = vmatprep.subr.bf16.mxu0 %v2593
    %3826 = vmatpush1.bf16.msra.mxu0 %v2592
    %3827 = vmatprep.subr.bf16.mxu0 %v2585
    %3828 = vmatpush1.bf16.msra.mxu0 %v2584
    %3829 = vmatprep.subr.bf16.mxu0 %v2577
    %3830 = vmatpush1.bf16.msra.mxu0 %v2576
    %3831 = vmatprep.subr.bf16.mxu0 %v2569
    %3832 = vmatpush1.bf16.msra.mxu0 %v2568
    %3833 = vmatprep.subr.bf16.mxu0 %v2561
    %3834 = vmatpush1.bf16.msra.mxu0 %v2560
    %3835 = vmatprep.subr.bf16.mxu0 %v2553
    %3836 = vmatpush1.bf16.msra.mxu0 %v2552
    %3837 = vmatprep.subr.bf16.mxu0 %v2545
    %3838 = vmatpush1.bf16.msra.mxu0 %v2544
    %3839 = vmatprep.subr.bf16.mxu0 %v2665
    %3840 = vmatpush2.bf16.msra.mxu0 %v2664
    %3841 = vmatprep.subr.bf16.mxu0 %v2657
    %3842 = vmatpush2.bf16.msra.mxu0 %v2656
    %3843 = vmatprep.subr.bf16.mxu0 %v2649
    %3844 = vmatpush2.bf16.msra.mxu0 %v2648
    %3845 = vmatprep.subr.bf16.mxu0 %v2641
    %3846 = vmatpush2.bf16.msra.mxu0 %v2640
    %3847 = vmatprep.subr.bf16.mxu0 %v2633
    %3848 = vmatpush2.bf16.msra.mxu0 %v2632
    %3849 = vmatprep.subr.bf16.mxu0 %v2625
    %3850 = vmatpush2.bf16.msra.mxu0 %v2624
    %3851 = vmatprep.subr.bf16.mxu0 %v2617
    %3852 = vmatpush2.bf16.msra.mxu0 %v2616
    %3853 = vmatprep.subr.bf16.mxu0 %v2609
    %3854 = vmatpush2.bf16.msra.mxu0 %v2608
    %3855 = vmatprep.mubr.bf16.mxu0 %v63
    %3856 = vmatmul.mubr.bf16.gmra.mxu0 %v62
    %v3857 = vpop.f32.mrf.mxu0
    %v3858 = vadd.f32 %v3815, %v3857
    %v3859 = vpop.f32.mrf.mxu0
    %v3860 = vadd.f32 %v3817, %v3859
    %v3861 = vpop.f32.mrf.mxu0
    %v3862 = vadd.f32 %v3819, %v3861
    %v3863 = vpop.f32.mrf.mxu0
    %v3864 = vadd.f32 %v3821, %v3863
    %3865 = vdwg.mxu0
    %v3866 = vmax.f32 %v3342, 0.0
    %v3867 = vmax.f32 %v3344, 0.0
    %v3868 = vmax.f32 %v3514, 0.0
    %v3869 = vmax.f32 %v3516, 0.0
    %v3870 = vmax.f32 %v3686, 0.0
    %v3871 = vmax.f32 %v3688, 0.0
    %v3872 = vmax.f32 %v3858, 0.0
    %v3873 = vmax.f32 %v3860, 0.0
    %v3874 = vmax.f32 %v3346, 0.0
    %v3875 = vmax.f32 %v3348, 0.0
    %v3876 = vmax.f32 %v3518, 0.0
    %v3877 = vmax.f32 %v3520, 0.0
    %v3878 = vmax.f32 %v3690, 0.0
    %v3879 = vmax.f32 %v3692, 0.0
    %v3880 = vmax.f32 %v3862, 0.0
    %v3881 = vmax.f32 %v3864, 0.0
    %3882 = vst [vmem:[%s3] sm:$0xff] %v3866
    %3883 = vst [vmem:[%s3 + $0x8] sm:$0xff] %v3867
    %3884 = vst [vmem:[%s3 + $0x10] sm:$0xff] %v3868
    %3885 = vst [vmem:[%s3 + $0x18] sm:$0xff] %v3869
    %3886 = vst [vmem:[%s3 + $0x20] sm:$0xff] %v3870
    %3887 = vst [vmem:[%s3 + $0x28] sm:$0xff] %v3871
    %3888 = vst [vmem:[%s3 + $0x30] sm:$0xff] %v3872
    %3889 = vst [vmem:[%s3 + $0x38] sm:$0xff] %v3873
    %3890 = vst [vmem:[%s3 + $0x40] sm:$0xff] %v3874
    %3891 = vst [vmem:[%s3 + $0x48] sm:$0xff] %v3875
    %3892 = vst [vmem:[%s3 + $0x50] sm:$0xff] %v3876
    %3893 = vst [vmem:[%s3 + $0x58] sm:$0xff] %v3877
    %3894 = vst [vmem:[%s3 + $0x60] sm:$0xff] %v3878
    %3895 = vst [vmem:[%s3 + $0x68] sm:$0xff] %v3879
    %3896 = vst [vmem:[%s3 + $0x70] sm:$0xff] %v3880
    %3897 = vst [vmem:[%s3 + $0x78] sm:$0xff] %v3881
    // Predicated region
    $region22: #{_forward.1} parent=1 // pred_check
      _
    $region23: #{_forward.1} parent=1 // pred_check_branch
      %3899 = sbr.rel (0) target = $region25
    $region24: #{_forward.1} parent=1 // pred_region
      _
    $region25: #{_forward.1} parent=1 // pred_fallthru
      _
    // Predicated region
    $region26: #{_forward.1} parent=1 // pred_check
      _
    $region27: #{_forward.1} parent=1 // pred_check_branch
      %3901 = sbr.rel (0) target = $region29
    $region28: #{_forward.1} parent=1 // pred_region
      _
    $region29: #{_forward.1} parent=1 // pred_fallthru
      _
    %3902 = vsyncpa [#allocation3], 1
    %3903 = vsyncpa [#allocation5], 1

</llo_original>
